<compile_context>
chip_gen: v7x
topology: tpu7x:2x2x1
jax: 0.10.0
libtpu: 0.0.40
codegen_flags: <defaults>
</compile_context>

<pallas_src>
import math
import functools

import jax
import jax.numpy as jnp
from jax.experimental import pallas as pl
from jax.experimental.pallas import tpu as pltpu

HEAD = 4
D_MODEL = 32
D_K = D_MODEL // HEAD


def mha_kernel(xq_ref, xk_ref, xv_ref, wqkv_ref, bqkv_ref, wo_ref, bo_ref,
               hmask_ref, out_ref, *attn_refs, head):
    seq, d_model = xq_ref.shape[1], xq_ref.shape[2]
    d_k = d_model // head
    scale = 1.0 / math.sqrt(d_k)

    # ---- Q/K/V projections: three (S, D) @ (D, D) MXU matmuls --------------
    # wqkv_ref holds [Wq^T, Wk^T, Wv^T] stacked on the leading axis; leading-
    # axis indexing is a free view (no lane extracts, no wasted block
    # products, no in-kernel transposes).
    q = jnp.dot(xq_ref[0], wqkv_ref[0],
                preferred_element_type=jnp.float32) + bqkv_ref[0]     # (S, D)
    k = jnp.dot(xk_ref[0], wqkv_ref[1],
                preferred_element_type=jnp.float32) + bqkv_ref[1]     # (S, D)
    v = jnp.dot(xv_ref[0], wqkv_ref[2],
                preferred_element_type=jnp.float32) + bqkv_ref[2]     # (S, D)

    # ---- Head split without lane slicing ------------------------------------
    # hmask[h, 0, d] = 1 iff lane d belongs to head h.  Multiplying by the
    # mask keeps heads in the lane dimension (VPU work only); the d_model-wide
    # contraction then equals the per-head d_k contraction, so no 8-lane
    # slices, concatenates or transposes are needed.
    hmask = hmask_ref[...]                                            # (H, 1, D)
    qh = q * hmask                                                    # (H, S, D)
    kh = k * hmask                                                    # (H, S, D)
    vh = v * hmask                                                    # (H, S, D)

    # ---- Scaled dot-product attention, batched over heads -------------------
    s = jnp.einsum('hqd,hkd->hqk', qh, kh,
                   preferred_element_type=jnp.float32) * scale       # (H, S, S)
    mx = jnp.max(s, axis=-1, keepdims=True)
    e = jnp.exp(s - mx)
    p = e / jnp.sum(e, axis=-1, keepdims=True)   # exact softmax (torch parity)

    if attn_refs:                                # optional attention output
        attn_ref, = attn_refs
        attn_ref[0] = p.astype(attn_ref.dtype)                       # (H, S, S)

    ctx_h = jnp.einsum('hqk,hkd->hqd', p, vh,
                       preferred_element_type=jnp.float32)           # (H, S, D)
    # vh is lane-masked, so each head only populates its own d_k lanes; the
    # head merge is therefore a leading-axis sum (no concat / relayout).
    ctx = jnp.sum(ctx_h, axis=0)                                      # (S, D)

    # ---- Output projection ---------------------------------------------------
    out = jnp.dot(ctx, wo_ref[...],
                  preferred_element_type=jnp.float32) + bo_ref[...]
    out_ref[0] = out.astype(out_ref.dtype)


@functools.partial(jax.jit, static_argnames=("return_attn",))
def multi_head_attention(query, key, value, params, return_attn=False):
    B, S, D = query.shape
    d_k = D // HEAD

    # Host-side (cheap, one-time) layout work: pre-transpose projection
    # weights so the kernel never transposes, stacked on a leading axis so
    # in-kernel selection is a free leading-axis view.
    w_qkv = jnp.stack([params["wq"].T, params["wk"].T, params["wv"].T])      # (3,D,D)
    b_qkv = jnp.stack([params["bq"], params["bk"], params["bv"]])[:, None, :]  # (3,1,D)
    wo_t = params["wo"].T                                                     # (D,D)
    bo = params["bo"].reshape(1, D)                                           # (1,D)

    # Static per-head lane mask (constant-folded by XLA; 512 B).
    lane_head = jnp.arange(D, dtype=jnp.int32) // d_k                         # (D,)
    hmask = (lane_head[None, :] == jnp.arange(HEAD, dtype=jnp.int32)[:, None])
    hmask = hmask.astype(jnp.float32)[:, None, :]                             # (H,1,D)

    out_shape = [jax.ShapeDtypeStruct((B, S, D), query.dtype)]
    out_specs = [pl.BlockSpec((1, S, D), lambda b: (b, 0, 0))]
    if return_attn:
        # Batch-major (B, HEAD, S, S): produced directly in the caller's
        # layout -> no wrapper-side transpose over the largest kernel output.
        out_shape.append(jax.ShapeDtypeStruct((B, HEAD, S, S), jnp.float32))
        out_specs.append(pl.BlockSpec((1, HEAD, S, S), lambda b: (b, 0, 0, 0)))

    kernel = functools.partial(mha_kernel, head=HEAD)

    results = pl.pallas_call(
        kernel,
        out_shape=tuple(out_shape),
        grid_spec=pltpu.PrefetchScalarGridSpec(
            num_scalar_prefetch=0,
            grid=(B,),                              # one step per batch element
            in_specs=[
                pl.BlockSpec((1, S, D), lambda b: (b, 0, 0)),     # query
                pl.BlockSpec((1, S, D), lambda b: (b, 0, 0)),     # key
                pl.BlockSpec((1, S, D), lambda b: (b, 0, 0)),     # value
                pl.BlockSpec((3, D, D), lambda b: (0, 0, 0)),     # [Wq^T,Wk^T,Wv^T]
                pl.BlockSpec((3, 1, D), lambda b: (0, 0, 0)),     # [bq,bk,bv]
                pl.BlockSpec((D, D), lambda b: (0, 0)),           # Wo^T
                pl.BlockSpec((1, D), lambda b: (0, 0)),           # bo
                pl.BlockSpec((HEAD, 1, D), lambda b: (0, 0, 0)),  # head lane mask
            ],
            out_specs=tuple(out_specs),
        ),
        compiler_params=pltpu.CompilerParams(
            # "parallel" batch axis lets v7x's two TensorCores split the grid;
            # harmless (one extra pipelined step) on single-TC v5e/v6e.
            dimension_semantics=("parallel",)),
    )(query, key, value, w_qkv, b_qkv, wo_t, bo, hmask)

    if return_attn:
        return results[0], results[1]
    return results[0]


def init_params(key, d_model):
    ks = jax.random.split(key, 8)
    bound = 1.0 / math.sqrt(d_model)

    def u(k, shape):
        return jax.random.uniform(k, shape, jnp.float32, -bound, bound)

    return {
        "wq": u(ks[0], (d_model, d_model)), "bq": u(ks[1], (d_model,)),
        "wk": u(ks[2], (d_model, d_model)), "bk": u(ks[3], (d_model,)),
        "wv": u(ks[4], (d_model, d_model)), "bv": u(ks[5], (d_model,)),
        "wo": u(ks[6], (d_model, d_model)), "bo": u(ks[7], (d_model,)),
    }


def reference_mha(query, key, value, params):
    """Plain-JAX reference of the (corrected) PyTorch forward (eval mode)."""
    B, S, D = query.shape
    hi = jax.lax.Precision.HIGHEST
    q = jnp.dot(query, params["wq"].T, precision=hi) + params["bq"]
    k = jnp.dot(key, params["wk"].T, precision=hi) + params["bk"]
    v = jnp.dot(value, params["wv"].T, precision=hi) + params["bv"]
    q = q.reshape(B, S, HEAD, D_K).transpose(0, 2, 1, 3)
    k = k.reshape(B, S, HEAD, D_K).transpose(0, 2, 1, 3)
    v = v.reshape(B, S, HEAD, D_K).transpose(0, 2, 1, 3)
    scores = jnp.einsum("bhqd,bhkd->bhqk", q, k, precision=hi) / math.sqrt(D_K)
    attn = jax.nn.softmax(scores, axis=-1)
    ctx = jnp.einsum("bhqk,bhkd->bhqd", attn, v, precision=hi)
    ctx = ctx.transpose(0, 2, 1, 3).reshape(B, S, D)
    return jnp.dot(ctx, params["wo"].T, precision=hi) + params["bo"], attn


if __name__ == "__main__":
    B, S, D = 2, 8, D_MODEL  # batch=2, seq=8, d_model=32, head=4

    root = jax.random.PRNGKey(0)
    k_q, k_k, k_v, k_p = jax.random.split(root, 4)
    query = jax.random.normal(k_q, (B, S, D), jnp.float32)
    key_ = jax.random.normal(k_k, (B, S, D), jnp.float32)
    value = jax.random.normal(k_v, (B, S, D), jnp.float32)
    params = init_params(k_p, D)

    # Fast path: attention probabilities neither materialized in HBM nor
    # written back (review item: make attn output optional).
    out_fast = multi_head_attention(query, key_, value, params)
    # Full path (parity with the PyTorch module's self.attn side output).
    out, attn = multi_head_attention(query, key_, value, params, return_attn=True)
    out_fast, out, attn = jax.block_until_ready((out_fast, out, attn))

    ref_out, ref_attn = reference_mha(query, key_, value, params)
    assert jnp.allclose(out, ref_out, atol=1e-3, rtol=1e-3), "output mismatch"
    assert jnp.allclose(out_fast, ref_out, atol=1e-3, rtol=1e-3), "fast-path mismatch"
    assert jnp.allclose(attn, ref_attn, atol=1e-3, rtol=1e-3), "attn mismatch"

    print("KERNEL_OK")
</pallas_src>

<mosaic_0001>
module attributes {stable_mosaic.version = 11 : i64} {
  func.func @mha_kernel(%arg0: i32, %arg1: memref<1x8x32xf32, #tpu.memory_space<vmem>>, %arg2: memref<1x8x32xf32, #tpu.memory_space<vmem>>, %arg3: memref<1x8x32xf32, #tpu.memory_space<vmem>>, %arg4: memref<3x32x32xf32, #tpu.memory_space<vmem>>, %arg5: memref<3x1x32xf32, #tpu.memory_space<vmem>>, %arg6: memref<32x32xf32, #tpu.memory_space<vmem>>, %arg7: memref<1x32xf32, #tpu.memory_space<vmem>>, %arg8: memref<4x1x32xf32, #tpu.memory_space<vmem>>, %arg9: memref<1x8x32xf32, #tpu.memory_space<vmem>>) attributes {dimension_semantics = [#tpu.dimension_semantics<parallel>], iteration_bounds = array<i64: 2>, scalar_prefetch = 0 : i64, scratch_operands = 0 : i64, tpu.core_type = #tpu.core_type<tc>, window_params = [{transform_indices = @transform_0, window_bounds = array<i64: 1, 8, 32>}, {transform_indices = @transform_1, window_bounds = array<i64: 1, 8, 32>}, {transform_indices = @transform_2, window_bounds = array<i64: 1, 8, 32>}, {pipeline_mode = #tpu.pipeline_mode<synchronous>, transform_indices = @transform_3, window_bounds = array<i64: 3, 32, 32>}, {pipeline_mode = #tpu.pipeline_mode<synchronous>, transform_indices = @transform_4, window_bounds = array<i64: 3, 1, 32>}, {pipeline_mode = #tpu.pipeline_mode<synchronous>, transform_indices = @transform_5, window_bounds = array<i64: 32, 32>}, {pipeline_mode = #tpu.pipeline_mode<synchronous>, transform_indices = @transform_6, window_bounds = array<i64: 1, 32>}, {pipeline_mode = #tpu.pipeline_mode<synchronous>, transform_indices = @transform_7, window_bounds = array<i64: 4, 1, 32>}, {transform_indices = @transform_8, window_bounds = array<i64: 1, 8, 32>}]} {
    %c0 = arith.constant 0 : index
    %c0_0 = arith.constant 0 : index
    %c0_1 = arith.constant 0 : index
    %0 = vector.load %arg1[%c0, %c0_0, %c0_1] : memref<1x8x32xf32, #tpu.memory_space<vmem>>, vector<1x8x32xf32>
    %1 = vector.shape_cast %0 : vector<1x8x32xf32> to vector<8x32xf32>
    %c0_2 = arith.constant 0 : index
    %c0_3 = arith.constant 0 : index
    %c0_4 = arith.constant 0 : index
    %2 = vector.load %arg4[%c0_2, %c0_3, %c0_4] : memref<3x32x32xf32, #tpu.memory_space<vmem>>, vector<1x32x32xf32>
    %3 = vector.shape_cast %2 : vector<1x32x32xf32> to vector<32x32xf32>
    %cst = arith.constant dense<0.000000e+00> : vector<8x32xf32>
    %4 = tpu.matmul %1, %3, %cst {dimension_numbers = #tpu.dot_dimension_numbers<[1], [0], [0], [1], [0, 0, 1, 1], [], []>} : vector<8x32xf32>, vector<32x32xf32>, vector<8x32xf32> -> vector<8x32xf32>
    %c0_5 = arith.constant 0 : index
    %c0_6 = arith.constant 0 : index
    %c0_7 = arith.constant 0 : index
    %5 = vector.load %arg5[%c0_5, %c0_6, %c0_7] : memref<3x1x32xf32, #tpu.memory_space<vmem>>, vector<1x1x32xf32>
    %6 = vector.shape_cast %5 : vector<1x1x32xf32> to vector<1x32xf32>
    %7 = vector.broadcast %6 : vector<1x32xf32> to vector<8x32xf32>
    %8 = arith.addf %4, %7 : vector<8x32xf32>
    %c0_8 = arith.constant 0 : index
    %c0_9 = arith.constant 0 : index
    %c0_10 = arith.constant 0 : index
    %9 = vector.load %arg2[%c0_8, %c0_9, %c0_10] : memref<1x8x32xf32, #tpu.memory_space<vmem>>, vector<1x8x32xf32>
    %10 = vector.shape_cast %9 : vector<1x8x32xf32> to vector<8x32xf32>
    %c1 = arith.constant 1 : index
    %c0_11 = arith.constant 0 : index
    %c0_12 = arith.constant 0 : index
    %11 = vector.load %arg4[%c1, %c0_11, %c0_12] : memref<3x32x32xf32, #tpu.memory_space<vmem>>, vector<1x32x32xf32>
    %12 = vector.shape_cast %11 : vector<1x32x32xf32> to vector<32x32xf32>
    %cst_13 = arith.constant dense<0.000000e+00> : vector<8x32xf32>
    %13 = tpu.matmul %10, %12, %cst_13 {dimension_numbers = #tpu.dot_dimension_numbers<[1], [0], [0], [1], [0, 0, 1, 1], [], []>} : vector<8x32xf32>, vector<32x32xf32>, vector<8x32xf32> -> vector<8x32xf32>
    %c1_14 = arith.constant 1 : index
    %c0_15 = arith.constant 0 : index
    %c0_16 = arith.constant 0 : index
    %14 = vector.load %arg5[%c1_14, %c0_15, %c0_16] : memref<3x1x32xf32, #tpu.memory_space<vmem>>, vector<1x1x32xf32>
    %15 = vector.shape_cast %14 : vector<1x1x32xf32> to vector<1x32xf32>
    %16 = vector.broadcast %15 : vector<1x32xf32> to vector<8x32xf32>
    %17 = arith.addf %13, %16 : vector<8x32xf32>
    %c0_17 = arith.constant 0 : index
    %c0_18 = arith.constant 0 : index
    %c0_19 = arith.constant 0 : index
    %18 = vector.load %arg3[%c0_17, %c0_18, %c0_19] : memref<1x8x32xf32, #tpu.memory_space<vmem>>, vector<1x8x32xf32>
    %19 = vector.shape_cast %18 : vector<1x8x32xf32> to vector<8x32xf32>
    %c2 = arith.constant 2 : index
    %c0_20 = arith.constant 0 : index
    %c0_21 = arith.constant 0 : index
    %20 = vector.load %arg4[%c2, %c0_20, %c0_21] : memref<3x32x32xf32, #tpu.memory_space<vmem>>, vector<1x32x32xf32>
    %21 = vector.shape_cast %20 : vector<1x32x32xf32> to vector<32x32xf32>
    %cst_22 = arith.constant dense<0.000000e+00> : vector<8x32xf32>
    %22 = tpu.matmul %19, %21, %cst_22 {dimension_numbers = #tpu.dot_dimension_numbers<[1], [0], [0], [1], [0, 0, 1, 1], [], []>} : vector<8x32xf32>, vector<32x32xf32>, vector<8x32xf32> -> vector<8x32xf32>
    %c2_23 = arith.constant 2 : index
    %c0_24 = arith.constant 0 : index
    %c0_25 = arith.constant 0 : index
    %23 = vector.load %arg5[%c2_23, %c0_24, %c0_25] : memref<3x1x32xf32, #tpu.memory_space<vmem>>, vector<1x1x32xf32>
    %24 = vector.shape_cast %23 : vector<1x1x32xf32> to vector<1x32xf32>
    %25 = vector.broadcast %24 : vector<1x32xf32> to vector<8x32xf32>
    %26 = arith.addf %22, %25 : vector<8x32xf32>
    %c0_26 = arith.constant 0 : index
    %c0_27 = arith.constant 0 : index
    %c0_28 = arith.constant 0 : index
    %27 = vector.load %arg8[%c0_26, %c0_27, %c0_28] : memref<4x1x32xf32, #tpu.memory_space<vmem>>, vector<4x1x32xf32>
    %28 = vector.shape_cast %8 : vector<8x32xf32> to vector<1x8x32xf32>
    %29 = vector.broadcast %28 : vector<1x8x32xf32> to vector<4x8x32xf32>
    %30 = vector.broadcast %27 : vector<4x1x32xf32> to vector<4x8x32xf32>
    %31 = arith.mulf %29, %30 : vector<4x8x32xf32>
    %32 = vector.shape_cast %17 : vector<8x32xf32> to vector<1x8x32xf32>
    %33 = vector.broadcast %32 : vector<1x8x32xf32> to vector<4x8x32xf32>
    %34 = vector.broadcast %27 : vector<4x1x32xf32> to vector<4x8x32xf32>
    %35 = arith.mulf %33, %34 : vector<4x8x32xf32>
    %36 = vector.shape_cast %26 : vector<8x32xf32> to vector<1x8x32xf32>
    %37 = vector.broadcast %36 : vector<1x8x32xf32> to vector<4x8x32xf32>
    %38 = vector.broadcast %27 : vector<4x1x32xf32> to vector<4x8x32xf32>
    %39 = arith.mulf %37, %38 : vector<4x8x32xf32>
    "tpu.trace_start"() <{level = 10 : i32, message = "hqd,hkd->hqk"}> : () -> ()
    %cst_29 = arith.constant dense<0.000000e+00> : vector<4x8x8xf32>
    %40 = tpu.matmul %31, %35, %cst_29 {dimension_numbers = #tpu.dot_dimension_numbers<[2], [2], [1], [1], [0, 0, 0, 1, 1, 1], [0], [0]>} : vector<4x8x32xf32>, vector<4x8x32xf32>, vector<4x8x8xf32> -> vector<4x8x8xf32>
    "tpu.trace_stop"() : () -> ()
    %cst_30 = arith.constant 0.353553385 : f32
    %41 = vector.broadcast %cst_30 : f32 to vector<4x8x8xf32>
    %42 = arith.mulf %40, %41 : vector<4x8x8xf32>
    %cst_31 = arith.constant dense<0xFF800000> : vector<4x8xf32>
    %43 = vector.multi_reduction <maximumf>, %42, %cst_31 [2] : vector<4x8x8xf32> to vector<4x8xf32>
    %44 = vector.shape_cast %43 : vector<4x8xf32> to vector<4x8x1xf32>
    %45 = vector.broadcast %44 : vector<4x8x1xf32> to vector<4x8x8xf32>
    %46 = arith.subf %42, %45 : vector<4x8x8xf32>
    %47 = math.exp %46 : vector<4x8x8xf32>
    %cst_32 = arith.constant dense<0.000000e+00> : vector<4x8xf32>
    %48 = vector.multi_reduction <add>, %47, %cst_32 [2] : vector<4x8x8xf32> to vector<4x8xf32>
    %49 = vector.shape_cast %48 : vector<4x8xf32> to vector<4x8x1xf32>
    %50 = vector.broadcast %49 : vector<4x8x1xf32> to vector<4x8x8xf32>
    %51 = arith.divf %47, %50 : vector<4x8x8xf32>
    "tpu.trace_start"() <{level = 10 : i32, message = "hqk,hkd->hqd"}> : () -> ()
    %cst_33 = arith.constant dense<0.000000e+00> : vector<4x8x32xf32>
    %52 = tpu.matmul %51, %39, %cst_33 {dimension_numbers = #tpu.dot_dimension_numbers<[2], [1], [1], [2], [0, 0, 0, 1, 1, 2], [0], [0]>} : vector<4x8x8xf32>, vector<4x8x32xf32>, vector<4x8x32xf32> -> vector<4x8x32xf32>
    "tpu.trace_stop"() : () -> ()
    %cst_34 = arith.constant dense<0.000000e+00> : vector<8x32xf32>
    %53 = vector.multi_reduction <add>, %52, %cst_34 [0] : vector<4x8x32xf32> to vector<8x32xf32>
    %c0_35 = arith.constant 0 : index
    %c0_36 = arith.constant 0 : index
    %54 = vector.load %arg6[%c0_35, %c0_36] : memref<32x32xf32, #tpu.memory_space<vmem>>, vector<32x32xf32>
    %cst_37 = arith.constant dense<0.000000e+00> : vector<8x32xf32>
    %55 = tpu.matmul %53, %54, %cst_37 {dimension_numbers = #tpu.dot_dimension_numbers<[1], [0], [0], [1], [0, 0, 1, 1], [], []>} : vector<8x32xf32>, vector<32x32xf32>, vector<8x32xf32> -> vector<8x32xf32>
    %c0_38 = arith.constant 0 : index
    %c0_39 = arith.constant 0 : index
    %56 = vector.load %arg7[%c0_38, %c0_39] : memref<1x32xf32, #tpu.memory_space<vmem>>, vector<1x32xf32>
    %57 = vector.broadcast %56 : vector<1x32xf32> to vector<8x32xf32>
    %58 = arith.addf %55, %57 : vector<8x32xf32>
    %c0_40 = arith.constant 0 : index
    %c0_41 = arith.constant 0 : index
    %c0_42 = arith.constant 0 : index
    %59 = vector.load %arg9[%c0_40, %c0_41, %c0_42] : memref<1x8x32xf32, #tpu.memory_space<vmem>>, vector<1x8x32xf32>
    %60 = vector.shape_cast %59 : vector<1x8x32xf32> to vector<8x32xf32>
    %61 = vector.shape_cast %58 : vector<8x32xf32> to vector<1x8x32xf32>
    tpu.vector_store %arg9[%c0_40, %c0_41, %c0_42], %61 {strides = array<i32>} : memref<1x8x32xf32, #tpu.memory_space<vmem>>, vector<1x8x32xf32>,
    return
  }
  func.func @transform_0(%arg0: i32) -> (i32, i32, i32) {
    %c0_i32 = arith.constant 0 : i32
    %c0_i32_0 = arith.constant 0 : i32
    %c0_i32_1 = arith.constant 0 : i32
    return %arg0, %c0_i32, %c0_i32_0 : i32, i32, i32
  }
  func.func @transform_1(%arg0: i32) -> (i32, i32, i32) {
    %c0_i32 = arith.constant 0 : i32
    %c0_i32_0 = arith.constant 0 : i32
    %c0_i32_1 = arith.constant 0 : i32
    return %arg0, %c0_i32, %c0_i32_0 : i32, i32, i32
  }
  func.func @transform_2(%arg0: i32) -> (i32, i32, i32) {
    %c0_i32 = arith.constant 0 : i32
    %c0_i32_0 = arith.constant 0 : i32
    %c0_i32_1 = arith.constant 0 : i32
    return %arg0, %c0_i32, %c0_i32_0 : i32, i32, i32
  }
  func.func @transform_3(%arg0: i32) -> (i32, i32, i32) {
    %c0_i32 = arith.constant 0 : i32
    %c0_i32_0 = arith.constant 0 : i32
    %c0_i32_1 = arith.constant 0 : i32
    %c0_i32_2 = arith.constant 0 : i32
    return %c0_i32, %c0_i32_0, %c0_i32_1 : i32, i32, i32
  }
  func.func @transform_4(%arg0: i32) -> (i32, i32, i32) {
    %c0_i32 = arith.constant 0 : i32
    %c0_i32_0 = arith.constant 0 : i32
    %c0_i32_1 = arith.constant 0 : i32
    %c0_i32_2 = arith.constant 0 : i32
    return %c0_i32, %c0_i32_0, %c0_i32_1 : i32, i32, i32
  }
  func.func @transform_5(%arg0: i32) -> (i32, i32) {
    %c0_i32 = arith.constant 0 : i32
    %c0_i32_0 = arith.constant 0 : i32
    %c0_i32_1 = arith.constant 0 : i32
    return %c0_i32, %c0_i32_0 : i32, i32
  }
  func.func @transform_6(%arg0: i32) -> (i32, i32) {
    %c0_i32 = arith.constant 0 : i32
    %c0_i32_0 = arith.constant 0 : i32
    %c0_i32_1 = arith.constant 0 : i32
    return %c0_i32, %c0_i32_0 : i32, i32
  }
  func.func @transform_7(%arg0: i32) -> (i32, i32, i32) {
    %c0_i32 = arith.constant 0 : i32
    %c0_i32_0 = arith.constant 0 : i32
    %c0_i32_1 = arith.constant 0 : i32
    %c0_i32_2 = arith.constant 0 : i32
    return %c0_i32, %c0_i32_0, %c0_i32_1 : i32, i32, i32
  }
  func.func @transform_8(%arg0: i32) -> (i32, i32, i32) {
    %c0_i32 = arith.constant 0 : i32
    %c0_i32_0 = arith.constant 0 : i32
    %c0_i32_1 = arith.constant 0 : i32
    return %arg0, %c0_i32, %c0_i32_0 : i32, i32, i32
  }
}

</mosaic_0001>

<llo_original>
// kernel: multi_head_attention.1
$region0: #{multi_head_attention.1}
  #allocation0 [shape = 'u32[]', space=smem, size = 0x4, offset = 0x4, fixed_abs, tag = 'smem constant byte address 0x4 - core index']
  #allocation1 [shape = 'u32[144,128]{1,0:T(1,128)}', space=vmem, size = 0x12000, scoped, tag = 'internal scratch']
  %s0 = inlined_call_operand.vmem [shape: f32[2,8,32], index: 0, kind: input, shape index: {}]
  %s1 = inlined_call_operand.vmem [shape: f32[2,8,32], index: 1, kind: input, shape index: {}]
  %s2 = inlined_call_operand.vmem [shape: f32[2,8,32], index: 2, kind: input, shape index: {}]
  %s3 = inlined_call_operand.vmem [shape: f32[3,32,32], index: 3, kind: input, shape index: {}]
  %s4 = inlined_call_operand.vmem [shape: f32[3,1,32], index: 4, kind: input, shape index: {}]
  %s5 = inlined_call_operand.vmem [shape: f32[32,32], index: 5, kind: input, shape index: {}]
  %s6 = inlined_call_operand.vmem [shape: f32[1,32], index: 6, kind: input, shape index: {}]
  %s7 = inlined_call_operand.vmem [shape: f32[4,1,32], index: 7, kind: input, shape index: {}]
  %s8 = inlined_call_operand.hbm [shape: f32[2,8,32], index: 8, kind: output, shape index: {}]
  %s9 = sld [smem:[#allocation0]]
  $region65: #{multi_head_attention.1} parent=0
    _
  %s11 = ssub.s32 1, %s9
  %s12 = scalar_select 0, %s11, %s9
  $region1: #{multi_head_attention.1} parent=0
    #allocation2 [shape = 'u8[8192]{0}', space=vmem, size = 0x2000, scoped, tag = 'output window, operand 0']
    #allocation3 [shape = 's32[2]{0}', space=sflag, size = 0x8, scoped, tag = 'scoped memory for multi_head_attention.1']
    %13 = vsyncpa [#allocation3], 0
    %s14 = scalar_lea.sflag [#allocation3], 1
    %15 = vsyncpa %s14, 0
    loop: start=0, step=1, limit=4
    $region2: #{multi_head_attention.1} parent=1 // loop_pre_header
      _
    $region3: #{multi_head_attention.1} parent=1 // loop_header
      %s17 = sphi 0, %s21
      %p18 = scmp.ge.s32.totalorder %s17, 4
      %s27 = sphi 0, %s29
      %s30 = sphi 0, %s27
      %s31 = sphi 0, %s30
      %s47 = sphi 0, %s31
      %s53 = sphi 0, %s55
      %s56 = sphi 0, %s53
      %s57 = sphi 0, %s56
      %s73 = sphi 0, %s57
      %s79 = sphi 0, %s81
      %s82 = sphi 0, %s79
      %s83 = sphi 0, %s82
      %s99 = sphi 0, %s83
      %s103 = sphi 0, %s103
      %s105 = sphi 0, %s103
      %s106 = sphi 0, %s105
      %s120 = sphi 0, %s106
      %s124 = sphi 0, %s124
      %s126 = sphi 0, %s124
      %s127 = sphi 0, %s126
      %s141 = sphi 0, %s127
      %s145 = sphi 0, %s145
      %s147 = sphi 0, %s145
      %s148 = sphi 0, %s147
      %s162 = sphi 0, %s148
      %s166 = sphi 0, %s166
      %s168 = sphi 0, %s166
      %s169 = sphi 0, %s168
      %s183 = sphi 0, %s169
      %s187 = sphi 0, %s187
      %s189 = sphi 0, %s187
      %s190 = sphi 0, %s189
      %s204 = sphi 0, %s190
      %s210 = sphi 0, %s212
      %s213 = sphi 0, %s210
      %s214 = sphi 0, %s213
      %s230 = sphi 0, %s214
    $region4: #{multi_head_attention.1} parent=1 // loop_header_branch
      %20 = sbr.rel (%p18) target = $region8
    $region5: #{multi_head_attention.1} parent=1 // loop_body
      %s22 = ssub.s32 %s17, 1
      %s23 = ssub.s32 %s17, 2
      %s24 = sadd.s32 %s17, 1
      %s25 = ssub.s32 %s17, %s24
      %p26 = scmp.eq.s32.totalorder %s25, 0
      %s28 = sadd.s32 %s27, 1
      %s29 = scalar_select %p26, %s27, %s28
      %p32 = pneg %p26
      %p33 = scmp.eq.s32.totalorder %s17, 1
      %p34 = por %p32, %p33
      %p35 = scmp.ne.s32.totalorder %s27, %s30
      %p36 = scmp.eq.s32.totalorder %s17, 0
      %p37 = por %p35, %p36
      %p38 = scmp.ne.s32.totalorder %s27, %s30
      %p39 = scmp.eq.s32.totalorder %s22, 1
      %p40 = por %p38, %p39
      %p41 = scmp.ne.s32.totalorder %s30, %s31
      %p42 = scmp.eq.s32.totalorder %s22, 0
      %p43 = por %p41, %p42
      %p44 = scmp.ne.s32.totalorder %s30, %s31
      %p45 = scmp.eq.s32.totalorder %s23, 1
      %p46 = por %p44, %p45
      %p48 = scmp.ne.s32.totalorder %s31, %s47
      %p49 = scmp.eq.s32.totalorder %s23, 0
      %p50 = por %p48, %p49
      %s51 = ssub.s32 %s17, %s24
      %p52 = scmp.eq.s32.totalorder %s51, 0
      %s54 = sadd.s32 %s53, 1
      %s55 = scalar_select %p52, %s53, %s54
      %p58 = pneg %p52
      %p59 = scmp.eq.s32.totalorder %s17, 1
      %p60 = por %p58, %p59
      %p61 = scmp.ne.s32.totalorder %s53, %s56
      %p62 = scmp.eq.s32.totalorder %s17, 0
      %p63 = por %p61, %p62
      %p64 = scmp.ne.s32.totalorder %s53, %s56
      %p65 = scmp.eq.s32.totalorder %s22, 1
      %p66 = por %p64, %p65
      %p67 = scmp.ne.s32.totalorder %s56, %s57
      %p68 = scmp.eq.s32.totalorder %s22, 0
      %p69 = por %p67, %p68
      %p70 = scmp.ne.s32.totalorder %s56, %s57
      %p71 = scmp.eq.s32.totalorder %s23, 1
      %p72 = por %p70, %p71
      %p74 = scmp.ne.s32.totalorder %s57, %s73
      %p75 = scmp.eq.s32.totalorder %s23, 0
      %p76 = por %p74, %p75
      %s77 = ssub.s32 %s17, %s24
      %p78 = scmp.eq.s32.totalorder %s77, 0
      %s80 = sadd.s32 %s79, 1
      %s81 = scalar_select %p78, %s79, %s80
      %p84 = pneg %p78
      %p85 = scmp.eq.s32.totalorder %s17, 1
      %p86 = por %p84, %p85
      %p87 = scmp.ne.s32.totalorder %s79, %s82
      %p88 = scmp.eq.s32.totalorder %s17, 0
      %p89 = por %p87, %p88
      %p90 = scmp.ne.s32.totalorder %s79, %s82
      %p91 = scmp.eq.s32.totalorder %s22, 1
      %p92 = por %p90, %p91
      %p93 = scmp.ne.s32.totalorder %s82, %s83
      %p94 = scmp.eq.s32.totalorder %s22, 0
      %p95 = por %p93, %p94
      %p96 = scmp.ne.s32.totalorder %s82, %s83
      %p97 = scmp.eq.s32.totalorder %s23, 1
      %p98 = por %p96, %p97
      %p100 = scmp.ne.s32.totalorder %s83, %s99
      %p101 = scmp.eq.s32.totalorder %s23, 0
      %p102 = por %p100, %p101
      %s104 = sadd.s32 %s103, 1
      %p107 = scmp.eq.s32.totalorder %s17, 1
      %p108 = scmp.ne.s32.totalorder %s103, %s105
      %p109 = scmp.eq.s32.totalorder %s17, 0
      %p110 = por %p108, %p109
      %p111 = scmp.ne.s32.totalorder %s103, %s105
      %p112 = scmp.eq.s32.totalorder %s22, 1
      %p113 = por %p111, %p112
      %p114 = scmp.ne.s32.totalorder %s105, %s106
      %p115 = scmp.eq.s32.totalorder %s22, 0
      %p116 = por %p114, %p115
      %p117 = scmp.ne.s32.totalorder %s105, %s106
      %p118 = scmp.eq.s32.totalorder %s23, 1
      %p119 = por %p117, %p118
      %p121 = scmp.ne.s32.totalorder %s106, %s120
      %p122 = scmp.eq.s32.totalorder %s23, 0
      %p123 = por %p121, %p122
      %s125 = sadd.s32 %s124, 1
      %p128 = scmp.eq.s32.totalorder %s17, 1
      %p129 = scmp.ne.s32.totalorder %s124, %s126
      %p130 = scmp.eq.s32.totalorder %s17, 0
      %p131 = por %p129, %p130
      %p132 = scmp.ne.s32.totalorder %s124, %s126
      %p133 = scmp.eq.s32.totalorder %s22, 1
      %p134 = por %p132, %p133
      %p135 = scmp.ne.s32.totalorder %s126, %s127
      %p136 = scmp.eq.s32.totalorder %s22, 0
      %p137 = por %p135, %p136
      %p138 = scmp.ne.s32.totalorder %s126, %s127
      %p139 = scmp.eq.s32.totalorder %s23, 1
      %p140 = por %p138, %p139
      %p142 = scmp.ne.s32.totalorder %s127, %s141
      %p143 = scmp.eq.s32.totalorder %s23, 0
      %p144 = por %p142, %p143
      %s146 = sadd.s32 %s145, 1
      %p149 = scmp.eq.s32.totalorder %s17, 1
      %p150 = scmp.ne.s32.totalorder %s145, %s147
      %p151 = scmp.eq.s32.totalorder %s17, 0
      %p152 = por %p150, %p151
      %p153 = scmp.ne.s32.totalorder %s145, %s147
      %p154 = scmp.eq.s32.totalorder %s22, 1
      %p155 = por %p153, %p154
      %p156 = scmp.ne.s32.totalorder %s147, %s148
      %p157 = scmp.eq.s32.totalorder %s22, 0
      %p158 = por %p156, %p157
      %p159 = scmp.ne.s32.totalorder %s147, %s148
      %p160 = scmp.eq.s32.totalorder %s23, 1
      %p161 = por %p159, %p160
      %p163 = scmp.ne.s32.totalorder %s148, %s162
      %p164 = scmp.eq.s32.totalorder %s23, 0
      %p165 = por %p163, %p164
      %s167 = sadd.s32 %s166, 1
      %p170 = scmp.eq.s32.totalorder %s17, 1
      %p171 = scmp.ne.s32.totalorder %s166, %s168
      %p172 = scmp.eq.s32.totalorder %s17, 0
      %p173 = por %p171, %p172
      %p174 = scmp.ne.s32.totalorder %s166, %s168
      %p175 = scmp.eq.s32.totalorder %s22, 1
      %p176 = por %p174, %p175
      %p177 = scmp.ne.s32.totalorder %s168, %s169
      %p178 = scmp.eq.s32.totalorder %s22, 0
      %p179 = por %p177, %p178
      %p180 = scmp.ne.s32.totalorder %s168, %s169
      %p181 = scmp.eq.s32.totalorder %s23, 1
      %p182 = por %p180, %p181
      %p184 = scmp.ne.s32.totalorder %s169, %s183
      %p185 = scmp.eq.s32.totalorder %s23, 0
      %p186 = por %p184, %p185
      %s188 = sadd.s32 %s187, 1
      %p191 = scmp.eq.s32.totalorder %s17, 1
      %p192 = scmp.ne.s32.totalorder %s187, %s189
      %p193 = scmp.eq.s32.totalorder %s17, 0
      %p194 = por %p192, %p193
      %p195 = scmp.ne.s32.totalorder %s187, %s189
      %p196 = scmp.eq.s32.totalorder %s22, 1
      %p197 = por %p195, %p196
      %p198 = scmp.ne.s32.totalorder %s189, %s190
      %p199 = scmp.eq.s32.totalorder %s22, 0
      %p200 = por %p198, %p199
      %p201 = scmp.ne.s32.totalorder %s189, %s190
      %p202 = scmp.eq.s32.totalorder %s23, 1
      %p203 = por %p201, %p202
      %p205 = scmp.ne.s32.totalorder %s190, %s204
      %p206 = scmp.eq.s32.totalorder %s23, 0
      %p207 = por %p205, %p206
      %s208 = ssub.s32 %s17, %s24
      %p209 = scmp.eq.s32.totalorder %s208, 0
      %s211 = sadd.s32 %s210, 1
      %s212 = scalar_select %p209, %s210, %s211
      %p215 = pneg %p209
      %p216 = scmp.eq.s32.totalorder %s17, 1
      %p217 = por %p215, %p216
      %p218 = scmp.ne.s32.totalorder %s210, %s213
      %p219 = scmp.eq.s32.totalorder %s17, 0
      %p220 = por %p218, %p219
      %p221 = scmp.ne.s32.totalorder %s210, %s213
      %p222 = scmp.eq.s32.totalorder %s22, 1
      %p223 = por %p221, %p222
      %p224 = scmp.ne.s32.totalorder %s213, %s214
      %p225 = scmp.eq.s32.totalorder %s22, 0
      %p226 = por %p224, %p225
      %p227 = scmp.ne.s32.totalorder %s213, %s214
      %p228 = scmp.eq.s32.totalorder %s23, 1
      %p229 = por %p227, %p228
      %p231 = scmp.ne.s32.totalorder %s214, %s230
      %p232 = scmp.eq.s32.totalorder %s23, 0
      %p233 = por %p231, %p232
      %p234 = scmp.le.s32.totalorder 1, %s17
      %p235 = scmp.lt.s32.totalorder %s17, 3
      %p236 = pnand %p234, %p235
      %p237 = pneg %p236
      // Predicated region
      $region9: #{multi_head_attention.1} parent=5 // pred_check
        _
      $region10: #{multi_head_attention.1} parent=5 // pred_check_branch
        %239 = sbr.rel (%p236) target = $region12
      $region11: #{multi_head_attention.1} parent=5 // pred_region
        %s240 = ssub.s32 %s17, 1
        // Predicated region
        $region13: #{multi_head_attention.1} parent=11 // pred_check
          %p241 = pneg %p116
        $region14: #{multi_head_attention.1} parent=11 // pred_check_branch
          %243 = sbr.rel (%p241) target = $region16
        $region15: #{multi_head_attention.1} parent=11 // pred_region
          _
        $region16: #{multi_head_attention.1} parent=11 // pred_fallthru
          _
        // Predicated region
        $region17: #{multi_head_attention.1} parent=11 // pred_check
          %p244 = pneg %p137
        $region18: #{multi_head_attention.1} parent=11 // pred_check_branch
          %246 = sbr.rel (%p244) target = $region20
        $region19: #{multi_head_attention.1} parent=11 // pred_region
          _
        $region20: #{multi_head_attention.1} parent=11 // pred_fallthru
          _
        // Predicated region
        $region21: #{multi_head_attention.1} parent=11 // pred_check
          %p247 = pneg %p158
        $region22: #{multi_head_attention.1} parent=11 // pred_check_branch
          %249 = sbr.rel (%p247) target = $region24
        $region23: #{multi_head_attention.1} parent=11 // pred_region
          _
        $region24: #{multi_head_attention.1} parent=11 // pred_fallthru
          _
        // Predicated region
        $region25: #{multi_head_attention.1} parent=11 // pred_check
          %p250 = pneg %p179
        $region26: #{multi_head_attention.1} parent=11 // pred_check_branch
          %252 = sbr.rel (%p250) target = $region28
        $region27: #{multi_head_attention.1} parent=11 // pred_region
          _
        $region28: #{multi_head_attention.1} parent=11 // pred_fallthru
          _
        // Predicated region
        $region29: #{multi_head_attention.1} parent=11 // pred_check
          %p253 = pneg %p200
        $region30: #{multi_head_attention.1} parent=11 // pred_check_branch
          %255 = sbr.rel (%p253) target = $region32
        $region31: #{multi_head_attention.1} parent=11 // pred_region
          _
        $region32: #{multi_head_attention.1} parent=11 // pred_fallthru
          _
      $region12: #{multi_head_attention.1} parent=5 // pred_fallthru
        _
      %p256 = scmp.lt.s32.totalorder %s17, 2
      // Predicated region
      $region33: #{multi_head_attention.1} parent=5 // pred_check
        %p257 = pneg %p256
      $region34: #{multi_head_attention.1} parent=5 // pred_check_branch
        %259 = sbr.rel (%p257) target = $region36
      $region35: #{multi_head_attention.1} parent=5 // pred_region
        // Predicated region
        $region37: #{multi_head_attention.1} parent=35 // pred_check
          %p260 = pneg %p37
        $region38: #{multi_head_attention.1} parent=35 // pred_check_branch
          %262 = sbr.rel (%p260) target = $region40
        $region39: #{multi_head_attention.1} parent=35 // pred_region
          %p263 = scmp.lt.s32.totalorder %s17, 1
          %s264 = scalar_select %p263, %s17, 1
          %s265 = smul.addr %s264, 8
          %s266 = scalar_lea.vmem %s0, %s265
        $region40: #{multi_head_attention.1} parent=35 // pred_fallthru
          _
        // Predicated region
        $region41: #{multi_head_attention.1} parent=35 // pred_check
          %p267 = pneg %p63
        $region42: #{multi_head_attention.1} parent=35 // pred_check_branch
          %269 = sbr.rel (%p267) target = $region44
        $region43: #{multi_head_attention.1} parent=35 // pred_region
          %p270 = scmp.lt.s32.totalorder %s17, 1
          %s271 = scalar_select %p270, %s17, 1
          %s272 = smul.addr %s271, 8
          %s273 = scalar_lea.vmem %s1, %s272
        $region44: #{multi_head_attention.1} parent=35 // pred_fallthru
          _
        // Predicated region
        $region45: #{multi_head_attention.1} parent=35 // pred_check
          %p274 = pneg %p89
        $region46: #{multi_head_attention.1} parent=35 // pred_check_branch
          %276 = sbr.rel (%p274) target = $region48
        $region47: #{multi_head_attention.1} parent=35 // pred_region
          %p277 = scmp.lt.s32.totalorder %s17, 1
          %s278 = scalar_select %p277, %s17, 1
          %s279 = smul.addr %s278, 8
          %s280 = scalar_lea.vmem %s2, %s279
        $region48: #{multi_head_attention.1} parent=35 // pred_fallthru
          _
      $region36: #{multi_head_attention.1} parent=5 // pred_fallthru
        _
      %p281 = scmp.le.s32.totalorder 1, %s17
      %p282 = scmp.lt.s32.totalorder %s17, 3
      %p283 = pnand %p281, %p282
      %p284 = pneg %p283
      // Predicated region
      $region49: #{multi_head_attention.1} parent=5 // pred_check
        _
      $region50: #{multi_head_attention.1} parent=5 // pred_check_branch
        %286 = sbr.rel (%p283) target = $region52
      $region51: #{multi_head_attention.1} parent=5 // pred_region
        %s287 = ssub.s32 %s17, 1
        %p288 = scmp.lt.s32.totalorder %s22, 1
        %s289 = scalar_select %p288, %s22, 1
        %s290 = smul.addr %s289, 8
        %s291 = scalar_lea.vmem %s0, %s290
        %p292 = pneg %p43
        %p293 = pneg %p40
        %p294 = scmp.lt.s32.totalorder %s22, 1
        %s295 = scalar_select %p294, %s22, 1
        %s296 = smul.addr %s295, 8
        %s297 = scalar_lea.vmem %s1, %s296
        %p298 = pneg %p69
        %p299 = pneg %p66
        %p300 = scmp.lt.s32.totalorder %s22, 1
        %s301 = scalar_select %p300, %s22, 1
        %s302 = smul.addr %s301, 8
        %s303 = scalar_lea.vmem %s2, %s302
        %p304 = pneg %p95
        %p305 = pneg %p92
        %p306 = pneg %p116
        %p307 = pneg %p113
        %p308 = pneg %p137
        %p309 = pneg %p134
        %p310 = pneg %p158
        %p311 = pneg %p155
        %p312 = pneg %p179
        %p313 = pneg %p176
        %p314 = pneg %p200
        %p315 = pneg %p197
        %p316 = pneg %p226
        %p317 = pneg %p223
        %s318 = sand.u32 %s213, 1
        %s319 = scalar_lea.sflag [#allocation3], %s318
        %s320 = sand.u32 %s213, 1
        %s321 = smul.addr %s320, 8
        %s322 = scalar_lea.vmem [#allocation2], %s321
        %p323 = scmp.lt.s32.totalorder %s22, 1
        %s324 = scalar_select %p323, %s22, 1
        %s325 = smul.addr %s324, 8
        %s326 = scalar_lea.vmem %s0, %s325
        %p327 = scmp.lt.s32.totalorder %s22, 1
        %s328 = scalar_select %p327, %s22, 1
        %s329 = smul.addr %s328, 8
        %s330 = scalar_lea.vmem %s1, %s329
        %p331 = scmp.lt.s32.totalorder %s22, 1
        %s332 = scalar_select %p331, %s22, 1
        %s333 = smul.addr %s332, 8
        %s334 = scalar_lea.vmem %s2, %s333
        %v335 = vld [vmem:[%s326] sm:$0xff]
        %v336 = vld [vmem:[%s3] sm:$0xff]
        %v337 = vld [vmem:[%s3 + $0x8] sm:$0xff]
        %v338 = vld [vmem:[%s3 + $0x10] sm:$0xff]
        %v339 = vld [vmem:[%s3 + $0x18] sm:$0xff]
        %v340 = vld [vmem:[%s4] sm:$0x1]
        %v342 = vlaneseq
        %v343 = vshrl.u32 %v342, 7
        %v344 = vsub.s32 0, %v343
        %v345 = vrot.slane %v340, %v344
        %vm347 = vcmask 261120
        %v349 = vsel %vm347, %v335, 0
        %351 = vmatprep.subr.mxu0 0.0
        %352 = vmatpush1.msra.mxu0 %v336
        %353 = vmatprep.subr.mxu0 0.0
        %354 = vmatpush1.msra.mxu0 %v337
        %355 = vmatprep.subr.mxu0 0.0
        %356 = vmatpush1.msra.mxu0 %v338
        %357 = vmatprep.subr.mxu0 0.0
        %358 = vmatpush1.msra.mxu0 %v339
        %359 = vmatprep.subr.mxu0 0.0
        %360 = vmatpush1.msra.mxu0 0.0
        %361 = vmatprep.subr.mxu0 0.0
        %362 = vmatpush1.msra.mxu0 0.0
        %363 = vmatprep.subr.mxu0 0.0
        %364 = vmatpush1.msra.mxu0 0.0
        %365 = vmatprep.subr.mxu0 0.0
        %366 = vmatpush1.msra.mxu0 0.0
        %367 = vmatprep.subr.mxu0 0.0
        %368 = vmatpush1.msra.mxu0 0.0
        %369 = vmatprep.subr.mxu0 0.0
        %370 = vmatpush1.msra.mxu0 0.0
        %371 = vmatprep.subr.mxu0 0.0
        %372 = vmatpush1.msra.mxu0 0.0
        %373 = vmatprep.subr.mxu0 0.0
        %374 = vmatpush1.msra.mxu0 0.0
        %375 = vmatprep.subr.mxu0 0.0
        %376 = vmatpush1.msra.mxu0 0.0
        %377 = vmatprep.subr.mxu0 0.0
        %378 = vmatpush1.msra.mxu0 0.0
        %379 = vmatprep.subr.mxu0 0.0
        %380 = vmatpush1.msra.mxu0 0.0
        %381 = vmatprep.subr.mxu0 0.0
        %382 = vmatpush1.msra.mxu0 0.0
        %383 = vmatprep.subr.mxu0 0.0
        %384 = vmatpush1.msra.mxu0 0.0
        %385 = vmatprep.subr.mxu0 0.0
        %386 = vmatpush1.msra.mxu0 0.0
        %387 = vmatprep.subr.mxu0 0.0
        %388 = vmatpush1.msra.mxu0 0.0
        %389 = vmatprep.subr.mxu0 0.0
        %390 = vmatpush1.msra.mxu0 0.0
        %391 = vmatprep.subr.mxu0 0.0
        %392 = vmatpush1.msra.mxu0 0.0
        %393 = vmatprep.subr.mxu0 0.0
        %394 = vmatpush1.msra.mxu0 0.0
        %395 = vmatprep.subr.mxu0 0.0
        %396 = vmatpush1.msra.mxu0 0.0
        %397 = vmatprep.subr.mxu0 0.0
        %398 = vmatpush1.msra.mxu0 0.0
        %399 = vmatprep.subr.mxu0 0.0
        %400 = vmatpush1.msra.mxu0 0.0
        %401 = vmatprep.subr.mxu0 0.0
        %402 = vmatpush1.msra.mxu0 0.0
        %403 = vmatprep.subr.mxu0 0.0
        %404 = vmatpush1.msra.mxu0 0.0
        %405 = vmatprep.subr.mxu0 0.0
        %406 = vmatpush1.msra.mxu0 0.0
        %407 = vmatprep.subr.mxu0 0.0
        %408 = vmatpush1.msra.mxu0 0.0
        %409 = vmatprep.subr.mxu0 0.0
        %410 = vmatpush1.msra.mxu0 0.0
        %411 = vmatprep.subr.mxu0 0.0
        %412 = vmatpush1.msra.mxu0 0.0
        %413 = vmatprep.subr.mxu0 0.0
        %414 = vmatpush1.msra.mxu0 0.0
        %415 = vmatprep.mubr.f32.mxu0 0.0
        %416 = vmatmul.mubr.f32.gmra.mrb[0].mxu0 %v349
        %v417 = vpop.f32.mrb[0].mxu0
        %v418 = vadd.f32 %v345, %v417
        %v419 = vpop.f32.mrb[0].mxu0
        %420 = vdwg.mxu0
        %v421 = vld [vmem:[%s330] sm:$0xff]
        %s422 = scalar_lea.vmem %s3, 32
        %v423 = vld [vmem:[%s422] sm:$0xff]
        %v424 = vld [vmem:[%s422 + $0x8] sm:$0xff]
        %v425 = vld [vmem:[%s422 + $0x10] sm:$0xff]
        %v426 = vld [vmem:[%s422 + $0x18] sm:$0xff]
        %s427 = scalar_lea.vmem %s4, 1
        %v428 = vld [vmem:[%s427] sm:$0x1]
        %v430 = vlaneseq
        %v431 = vshrl.u32 %v430, 7
        %v432 = vsub.s32 0, %v431
        %v433 = vrot.slane %v428, %v432
        %v436 = vsel %vm347, %v421, 0
        %438 = vmatprep.subr.mxu0 0.0
        %439 = vmatpush1.msra.mxu0 %v423
        %440 = vmatprep.subr.mxu0 0.0
        %441 = vmatpush1.msra.mxu0 %v424
        %442 = vmatprep.subr.mxu0 0.0
        %443 = vmatpush1.msra.mxu0 %v425
        %444 = vmatprep.subr.mxu0 0.0
        %445 = vmatpush1.msra.mxu0 %v426
        %446 = vmatprep.subr.mxu0 0.0
        %447 = vmatpush1.msra.mxu0 0.0
        %448 = vmatprep.subr.mxu0 0.0
        %449 = vmatpush1.msra.mxu0 0.0
        %450 = vmatprep.subr.mxu0 0.0
        %451 = vmatpush1.msra.mxu0 0.0
        %452 = vmatprep.subr.mxu0 0.0
        %453 = vmatpush1.msra.mxu0 0.0
        %454 = vmatprep.subr.mxu0 0.0
        %455 = vmatpush1.msra.mxu0 0.0
        %456 = vmatprep.subr.mxu0 0.0
        %457 = vmatpush1.msra.mxu0 0.0
        %458 = vmatprep.subr.mxu0 0.0
        %459 = vmatpush1.msra.mxu0 0.0
        %460 = vmatprep.subr.mxu0 0.0
        %461 = vmatpush1.msra.mxu0 0.0
        %462 = vmatprep.subr.mxu0 0.0
        %463 = vmatpush1.msra.mxu0 0.0
        %464 = vmatprep.subr.mxu0 0.0
        %465 = vmatpush1.msra.mxu0 0.0
        %466 = vmatprep.subr.mxu0 0.0
        %467 = vmatpush1.msra.mxu0 0.0
        %468 = vmatprep.subr.mxu0 0.0
        %469 = vmatpush1.msra.mxu0 0.0
        %470 = vmatprep.subr.mxu0 0.0
        %471 = vmatpush1.msra.mxu0 0.0
        %472 = vmatprep.subr.mxu0 0.0
        %473 = vmatpush1.msra.mxu0 0.0
        %474 = vmatprep.subr.mxu0 0.0
        %475 = vmatpush1.msra.mxu0 0.0
        %476 = vmatprep.subr.mxu0 0.0
        %477 = vmatpush1.msra.mxu0 0.0
        %478 = vmatprep.subr.mxu0 0.0
        %479 = vmatpush1.msra.mxu0 0.0
        %480 = vmatprep.subr.mxu0 0.0
        %481 = vmatpush1.msra.mxu0 0.0
        %482 = vmatprep.subr.mxu0 0.0
        %483 = vmatpush1.msra.mxu0 0.0
        %484 = vmatprep.subr.mxu0 0.0
        %485 = vmatpush1.msra.mxu0 0.0
        %486 = vmatprep.subr.mxu0 0.0
        %487 = vmatpush1.msra.mxu0 0.0
        %488 = vmatprep.subr.mxu0 0.0
        %489 = vmatpush1.msra.mxu0 0.0
        %490 = vmatprep.subr.mxu0 0.0
        %491 = vmatpush1.msra.mxu0 0.0
        %492 = vmatprep.subr.mxu0 0.0
        %493 = vmatpush1.msra.mxu0 0.0
        %494 = vmatprep.subr.mxu0 0.0
        %495 = vmatpush1.msra.mxu0 0.0
        %496 = vmatprep.subr.mxu0 0.0
        %497 = vmatpush1.msra.mxu0 0.0
        %498 = vmatprep.subr.mxu0 0.0
        %499 = vmatpush1.msra.mxu0 0.0
        %500 = vmatprep.subr.mxu0 0.0
        %501 = vmatpush1.msra.mxu0 0.0
        %502 = vmatprep.mubr.f32.mxu0 0.0
        %503 = vmatmul.mubr.f32.gmra.mrb[0].mxu0 %v436
        %v504 = vpop.f32.mrb[0].mxu0
        %v505 = vadd.f32 %v433, %v504
        %v506 = vpop.f32.mrb[0].mxu0
        %507 = vdwg.mxu0
        %v508 = vld [vmem:[%s334] sm:$0xff]
        %s509 = scalar_lea.vmem %s3, 64
        %v510 = vld [vmem:[%s509] sm:$0xff]
        %v511 = vld [vmem:[%s509 + $0x8] sm:$0xff]
        %v512 = vld [vmem:[%s509 + $0x10] sm:$0xff]
        %v513 = vld [vmem:[%s509 + $0x18] sm:$0xff]
        %s514 = scalar_lea.vmem %s4, 2
        %v515 = vld [vmem:[%s514] sm:$0x1]
        %v517 = vlaneseq
        %v518 = vshrl.u32 %v517, 7
        %v519 = vsub.s32 0, %v518
        %v520 = vrot.slane %v515, %v519
        %v523 = vsel %vm347, %v508, 0
        %525 = vmatprep.subr.mxu0 0.0
        %526 = vmatpush1.msra.mxu0 %v510
        %527 = vmatprep.subr.mxu0 0.0
        %528 = vmatpush1.msra.mxu0 %v511
        %529 = vmatprep.subr.mxu0 0.0
        %530 = vmatpush1.msra.mxu0 %v512
        %531 = vmatprep.subr.mxu0 0.0
        %532 = vmatpush1.msra.mxu0 %v513
        %533 = vmatprep.subr.mxu0 0.0
        %534 = vmatpush1.msra.mxu0 0.0
        %535 = vmatprep.subr.mxu0 0.0
        %536 = vmatpush1.msra.mxu0 0.0
        %537 = vmatprep.subr.mxu0 0.0
        %538 = vmatpush1.msra.mxu0 0.0
        %539 = vmatprep.subr.mxu0 0.0
        %540 = vmatpush1.msra.mxu0 0.0
        %541 = vmatprep.subr.mxu0 0.0
        %542 = vmatpush1.msra.mxu0 0.0
        %543 = vmatprep.subr.mxu0 0.0
        %544 = vmatpush1.msra.mxu0 0.0
        %545 = vmatprep.subr.mxu0 0.0
        %546 = vmatpush1.msra.mxu0 0.0
        %547 = vmatprep.subr.mxu0 0.0
        %548 = vmatpush1.msra.mxu0 0.0
        %549 = vmatprep.subr.mxu0 0.0
        %550 = vmatpush1.msra.mxu0 0.0
        %551 = vmatprep.subr.mxu0 0.0
        %552 = vmatpush1.msra.mxu0 0.0
        %553 = vmatprep.subr.mxu0 0.0
        %554 = vmatpush1.msra.mxu0 0.0
        %555 = vmatprep.subr.mxu0 0.0
        %556 = vmatpush1.msra.mxu0 0.0
        %557 = vmatprep.subr.mxu0 0.0
        %558 = vmatpush1.msra.mxu0 0.0
        %559 = vmatprep.subr.mxu0 0.0
        %560 = vmatpush1.msra.mxu0 0.0
        %561 = vmatprep.subr.mxu0 0.0
        %562 = vmatpush1.msra.mxu0 0.0
        %563 = vmatprep.subr.mxu0 0.0
        %564 = vmatpush1.msra.mxu0 0.0
        %565 = vmatprep.subr.mxu0 0.0
        %566 = vmatpush1.msra.mxu0 0.0
        %567 = vmatprep.subr.mxu0 0.0
        %568 = vmatpush1.msra.mxu0 0.0
        %569 = vmatprep.subr.mxu0 0.0
        %570 = vmatpush1.msra.mxu0 0.0
        %571 = vmatprep.subr.mxu0 0.0
        %572 = vmatpush1.msra.mxu0 0.0
        %573 = vmatprep.subr.mxu0 0.0
        %574 = vmatpush1.msra.mxu0 0.0
        %575 = vmatprep.subr.mxu0 0.0
        %576 = vmatpush1.msra.mxu0 0.0
        %577 = vmatprep.subr.mxu0 0.0
        %578 = vmatpush1.msra.mxu0 0.0
        %579 = vmatprep.subr.mxu0 0.0
        %580 = vmatpush1.msra.mxu0 0.0
        %581 = vmatprep.subr.mxu0 0.0
        %582 = vmatpush1.msra.mxu0 0.0
        %583 = vmatprep.subr.mxu0 0.0
        %584 = vmatpush1.msra.mxu0 0.0
        %585 = vmatprep.subr.mxu0 0.0
        %586 = vmatpush1.msra.mxu0 0.0
        %587 = vmatprep.subr.mxu0 0.0
        %588 = vmatpush1.msra.mxu0 0.0
        %589 = vmatprep.mubr.f32.mxu0 0.0
        %590 = vmatmul.mubr.f32.gmra.mrb[0].mxu0 %v523
        %v591 = vpop.f32.mrb[0].mxu0
        %v592 = vadd.f32 %v520, %v591
        %v593 = vpop.f32.mrb[0].mxu0
        %594 = vdwg.mxu0
        %v595 = vld [vmem:[%s7] sm:$0x1]
        %v596 = vld [vmem:[%s7 + $0x1] sm:$0x1]
        %v597 = vld [vmem:[%s7 + $0x2] sm:$0x1]
        %v598 = vld [vmem:[%s7 + $0x3] sm:$0x1]
        %v603 = vlaneseq
        %v604 = vshrl.u32 %v603, 7
        %v605 = vsub.s32 0, %v604
        %v606 = vrot.slane %v595, %v605
        %v607 = vlaneseq
        %v608 = vshrl.u32 %v607, 7
        %v609 = vsub.s32 0, %v608
        %v610 = vrot.slane %v596, %v609
        %v611 = vlaneseq
        %v612 = vshrl.u32 %v611, 7
        %v613 = vsub.s32 0, %v612
        %v614 = vrot.slane %v597, %v613
        %v615 = vlaneseq
        %v616 = vshrl.u32 %v615, 7
        %v617 = vsub.s32 0, %v616
        %v618 = vrot.slane %v598, %v617
        %v623 = vmul.f32 %v418, %v606
        %v624 = vmul.f32 %v418, %v610
        %v625 = vmul.f32 %v418, %v614
        %v626 = vmul.f32 %v418, %v618
        %v627 = vmul.f32 %v505, %v606
        %v628 = vmul.f32 %v505, %v610
        %v629 = vmul.f32 %v505, %v614
        %v630 = vmul.f32 %v505, %v618
        %v631 = vmul.f32 %v592, %v606
        %v632 = vmul.f32 %v592, %v610
        %v633 = vmul.f32 %v592, %v614
        %v634 = vmul.f32 %v592, %v618
        %v636 = vsel %vm347, %v623, 0
        %v639 = vsel %vm347, %v627, 0
        %641 = vmatprep.subr.mxu0 0.0
        %642 = vmatpush1.xpose.msra.mxu0 %v639
        %643 = vmatprep.subr.mxu0 0.0
        %644 = vmatpush1.xpose.msra.mxu0 0.0
        %645 = vmatprep.subr.mxu0 0.0
        %646 = vmatpush1.xpose.msra.mxu0 0.0
        %647 = vmatprep.subr.mxu0 0.0
        %648 = vmatpush1.xpose.msra.mxu0 0.0
        %649 = vmatprep.subr.mxu0 0.0
        %650 = vmatpush1.xpose.msra.mxu0 0.0
        %651 = vmatprep.subr.mxu0 0.0
        %652 = vmatpush1.xpose.msra.mxu0 0.0
        %653 = vmatprep.subr.mxu0 0.0
        %654 = vmatpush1.xpose.msra.mxu0 0.0
        %655 = vmatprep.subr.mxu0 0.0
        %656 = vmatpush1.xpose.msra.mxu0 0.0
        %657 = vmatprep.subr.mxu0 0.0
        %658 = vmatpush1.xpose.msra.mxu0 0.0
        %659 = vmatprep.subr.mxu0 0.0
        %660 = vmatpush1.xpose.msra.mxu0 0.0
        %661 = vmatprep.subr.mxu0 0.0
        %662 = vmatpush1.xpose.msra.mxu0 0.0
        %663 = vmatprep.subr.mxu0 0.0
        %664 = vmatpush1.xpose.msra.mxu0 0.0
        %665 = vmatprep.subr.mxu0 0.0
        %666 = vmatpush1.xpose.msra.mxu0 0.0
        %667 = vmatprep.subr.mxu0 0.0
        %668 = vmatpush1.xpose.msra.mxu0 0.0
        %669 = vmatprep.subr.mxu0 0.0
        %670 = vmatpush1.xpose.msra.mxu0 0.0
        %671 = vmatprep.subr.mxu0 0.0
        %672 = vmatpush1.xpose.msra.mxu0 0.0
        %673 = vmatprep.subr.mxu0 0.0
        %674 = vmatpush1.xpose.msra.mxu0 0.0
        %675 = vmatprep.subr.mxu0 0.0
        %676 = vmatpush1.xpose.msra.mxu0 0.0
        %677 = vmatprep.subr.mxu0 0.0
        %678 = vmatpush1.xpose.msra.mxu0 0.0
        %679 = vmatprep.subr.mxu0 0.0
        %680 = vmatpush1.xpose.msra.mxu0 0.0
        %681 = vmatprep.subr.mxu0 0.0
        %682 = vmatpush1.xpose.msra.mxu0 0.0
        %683 = vmatprep.subr.mxu0 0.0
        %684 = vmatpush1.xpose.msra.mxu0 0.0
        %685 = vmatprep.subr.mxu0 0.0
        %686 = vmatpush1.xpose.msra.mxu0 0.0
        %687 = vmatprep.subr.mxu0 0.0
        %688 = vmatpush1.xpose.msra.mxu0 0.0
        %689 = vmatprep.subr.mxu0 0.0
        %690 = vmatpush1.xpose.msra.mxu0 0.0
        %691 = vmatprep.subr.mxu0 0.0
        %692 = vmatpush1.xpose.msra.mxu0 0.0
        %693 = vmatprep.subr.mxu0 0.0
        %694 = vmatpush1.xpose.msra.mxu0 0.0
        %695 = vmatprep.subr.mxu0 0.0
        %696 = vmatpush1.xpose.msra.mxu0 0.0
        %697 = vmatprep.subr.mxu0 0.0
        %698 = vmatpush1.xpose.msra.mxu0 0.0
        %699 = vmatprep.subr.mxu0 0.0
        %700 = vmatpush1.xpose.msra.mxu0 0.0
        %701 = vmatprep.subr.mxu0 0.0
        %702 = vmatpush1.xpose.msra.mxu0 0.0
        %703 = vmatprep.subr.mxu0 0.0
        %704 = vmatpush1.xpose.msra.mxu0 0.0
        %705 = vmatprep.mubr.f32.mxu0 0.0
        %706 = vmatmul.mubr.f32.gmra.mrb[0].mxu0 %v636
        %v707 = vpop.f32.mrb[0].mxu0
        %v708 = vadd.f32 0.0, %v707
        %v709 = vpop.f32.mrb[0].mxu0
        %710 = vdwg.mxu0
        %v712 = vsel %vm347, %v624, 0
        %v715 = vsel %vm347, %v628, 0
        %717 = vmatprep.subr.mxu0 0.0
        %718 = vmatpush1.xpose.msra.mxu0 %v715
        %719 = vmatprep.subr.mxu0 0.0
        %720 = vmatpush1.xpose.msra.mxu0 0.0
        %721 = vmatprep.subr.mxu0 0.0
        %722 = vmatpush1.xpose.msra.mxu0 0.0
        %723 = vmatprep.subr.mxu0 0.0
        %724 = vmatpush1.xpose.msra.mxu0 0.0
        %725 = vmatprep.subr.mxu0 0.0
        %726 = vmatpush1.xpose.msra.mxu0 0.0
        %727 = vmatprep.subr.mxu0 0.0
        %728 = vmatpush1.xpose.msra.mxu0 0.0
        %729 = vmatprep.subr.mxu0 0.0
        %730 = vmatpush1.xpose.msra.mxu0 0.0
        %731 = vmatprep.subr.mxu0 0.0
        %732 = vmatpush1.xpose.msra.mxu0 0.0
        %733 = vmatprep.subr.mxu0 0.0
        %734 = vmatpush1.xpose.msra.mxu0 0.0
        %735 = vmatprep.subr.mxu0 0.0
        %736 = vmatpush1.xpose.msra.mxu0 0.0
        %737 = vmatprep.subr.mxu0 0.0
        %738 = vmatpush1.xpose.msra.mxu0 0.0
        %739 = vmatprep.subr.mxu0 0.0
        %740 = vmatpush1.xpose.msra.mxu0 0.0
        %741 = vmatprep.subr.mxu0 0.0
        %742 = vmatpush1.xpose.msra.mxu0 0.0
        %743 = vmatprep.subr.mxu0 0.0
        %744 = vmatpush1.xpose.msra.mxu0 0.0
        %745 = vmatprep.subr.mxu0 0.0
        %746 = vmatpush1.xpose.msra.mxu0 0.0
        %747 = vmatprep.subr.mxu0 0.0
        %748 = vmatpush1.xpose.msra.mxu0 0.0
        %749 = vmatprep.subr.mxu0 0.0
        %750 = vmatpush1.xpose.msra.mxu0 0.0
        %751 = vmatprep.subr.mxu0 0.0
        %752 = vmatpush1.xpose.msra.mxu0 0.0
        %753 = vmatprep.subr.mxu0 0.0
        %754 = vmatpush1.xpose.msra.mxu0 0.0
        %755 = vmatprep.subr.mxu0 0.0
        %756 = vmatpush1.xpose.msra.mxu0 0.0
        %757 = vmatprep.subr.mxu0 0.0
        %758 = vmatpush1.xpose.msra.mxu0 0.0
        %759 = vmatprep.subr.mxu0 0.0
        %760 = vmatpush1.xpose.msra.mxu0 0.0
        %761 = vmatprep.subr.mxu0 0.0
        %762 = vmatpush1.xpose.msra.mxu0 0.0
        %763 = vmatprep.subr.mxu0 0.0
        %764 = vmatpush1.xpose.msra.mxu0 0.0
        %765 = vmatprep.subr.mxu0 0.0
        %766 = vmatpush1.xpose.msra.mxu0 0.0
        %767 = vmatprep.subr.mxu0 0.0
        %768 = vmatpush1.xpose.msra.mxu0 0.0
        %769 = vmatprep.subr.mxu0 0.0
        %770 = vmatpush1.xpose.msra.mxu0 0.0
        %771 = vmatprep.subr.mxu0 0.0
        %772 = vmatpush1.xpose.msra.mxu0 0.0
        %773 = vmatprep.subr.mxu0 0.0
        %774 = vmatpush1.xpose.msra.mxu0 0.0
        %775 = vmatprep.subr.mxu0 0.0
        %776 = vmatpush1.xpose.msra.mxu0 0.0
        %777 = vmatprep.subr.mxu0 0.0
        %778 = vmatpush1.xpose.msra.mxu0 0.0
        %779 = vmatprep.subr.mxu0 0.0
        %780 = vmatpush1.xpose.msra.mxu0 0.0
        %781 = vmatprep.mubr.f32.mxu0 0.0
        %782 = vmatmul.mubr.f32.gmra.mrb[0].mxu0 %v712
        %v783 = vpop.f32.mrb[0].mxu0
        %v784 = vadd.f32 0.0, %v783
        %v785 = vpop.f32.mrb[0].mxu0
        %786 = vdwg.mxu0
        %v788 = vsel %vm347, %v625, 0
        %v791 = vsel %vm347, %v629, 0
        %793 = vmatprep.subr.mxu0 0.0
        %794 = vmatpush1.xpose.msra.mxu0 %v791
        %795 = vmatprep.subr.mxu0 0.0
        %796 = vmatpush1.xpose.msra.mxu0 0.0
        %797 = vmatprep.subr.mxu0 0.0
        %798 = vmatpush1.xpose.msra.mxu0 0.0
        %799 = vmatprep.subr.mxu0 0.0
        %800 = vmatpush1.xpose.msra.mxu0 0.0
        %801 = vmatprep.subr.mxu0 0.0
        %802 = vmatpush1.xpose.msra.mxu0 0.0
        %803 = vmatprep.subr.mxu0 0.0
        %804 = vmatpush1.xpose.msra.mxu0 0.0
        %805 = vmatprep.subr.mxu0 0.0
        %806 = vmatpush1.xpose.msra.mxu0 0.0
        %807 = vmatprep.subr.mxu0 0.0
        %808 = vmatpush1.xpose.msra.mxu0 0.0
        %809 = vmatprep.subr.mxu0 0.0
        %810 = vmatpush1.xpose.msra.mxu0 0.0
        %811 = vmatprep.subr.mxu0 0.0
        %812 = vmatpush1.xpose.msra.mxu0 0.0
        %813 = vmatprep.subr.mxu0 0.0
        %814 = vmatpush1.xpose.msra.mxu0 0.0
        %815 = vmatprep.subr.mxu0 0.0
        %816 = vmatpush1.xpose.msra.mxu0 0.0
        %817 = vmatprep.subr.mxu0 0.0
        %818 = vmatpush1.xpose.msra.mxu0 0.0
        %819 = vmatprep.subr.mxu0 0.0
        %820 = vmatpush1.xpose.msra.mxu0 0.0
        %821 = vmatprep.subr.mxu0 0.0
        %822 = vmatpush1.xpose.msra.mxu0 0.0
        %823 = vmatprep.subr.mxu0 0.0
        %824 = vmatpush1.xpose.msra.mxu0 0.0
        %825 = vmatprep.subr.mxu0 0.0
        %826 = vmatpush1.xpose.msra.mxu0 0.0
        %827 = vmatprep.subr.mxu0 0.0
        %828 = vmatpush1.xpose.msra.mxu0 0.0
        %829 = vmatprep.subr.mxu0 0.0
        %830 = vmatpush1.xpose.msra.mxu0 0.0
        %831 = vmatprep.subr.mxu0 0.0
        %832 = vmatpush1.xpose.msra.mxu0 0.0
        %833 = vmatprep.subr.mxu0 0.0
        %834 = vmatpush1.xpose.msra.mxu0 0.0
        %835 = vmatprep.subr.mxu0 0.0
        %836 = vmatpush1.xpose.msra.mxu0 0.0
        %837 = vmatprep.subr.mxu0 0.0
        %838 = vmatpush1.xpose.msra.mxu0 0.0
        %839 = vmatprep.subr.mxu0 0.0
        %840 = vmatpush1.xpose.msra.mxu0 0.0
        %841 = vmatprep.subr.mxu0 0.0
        %842 = vmatpush1.xpose.msra.mxu0 0.0
        %843 = vmatprep.subr.mxu0 0.0
        %844 = vmatpush1.xpose.msra.mxu0 0.0
        %845 = vmatprep.subr.mxu0 0.0
        %846 = vmatpush1.xpose.msra.mxu0 0.0
        %847 = vmatprep.subr.mxu0 0.0
        %848 = vmatpush1.xpose.msra.mxu0 0.0
        %849 = vmatprep.subr.mxu0 0.0
        %850 = vmatpush1.xpose.msra.mxu0 0.0
        %851 = vmatprep.subr.mxu0 0.0
        %852 = vmatpush1.xpose.msra.mxu0 0.0
        %853 = vmatprep.subr.mxu0 0.0
        %854 = vmatpush1.xpose.msra.mxu0 0.0
        %855 = vmatprep.subr.mxu0 0.0
        %856 = vmatpush1.xpose.msra.mxu0 0.0
        %857 = vmatprep.mubr.f32.mxu0 0.0
        %858 = vmatmul.mubr.f32.gmra.mrb[0].mxu0 %v788
        %v859 = vpop.f32.mrb[0].mxu0
        %v860 = vadd.f32 0.0, %v859
        %v861 = vpop.f32.mrb[0].mxu0
        %862 = vdwg.mxu0
        %v864 = vsel %vm347, %v626, 0
        %v867 = vsel %vm347, %v630, 0
        %869 = vmatprep.subr.mxu0 0.0
        %870 = vmatpush1.xpose.msra.mxu0 %v867
        %871 = vmatprep.subr.mxu0 0.0
        %872 = vmatpush1.xpose.msra.mxu0 0.0
        %873 = vmatprep.subr.mxu0 0.0
        %874 = vmatpush1.xpose.msra.mxu0 0.0
        %875 = vmatprep.subr.mxu0 0.0
        %876 = vmatpush1.xpose.msra.mxu0 0.0
        %877 = vmatprep.subr.mxu0 0.0
        %878 = vmatpush1.xpose.msra.mxu0 0.0
        %879 = vmatprep.subr.mxu0 0.0
        %880 = vmatpush1.xpose.msra.mxu0 0.0
        %881 = vmatprep.subr.mxu0 0.0
        %882 = vmatpush1.xpose.msra.mxu0 0.0
        %883 = vmatprep.subr.mxu0 0.0
        %884 = vmatpush1.xpose.msra.mxu0 0.0
        %885 = vmatprep.subr.mxu0 0.0
        %886 = vmatpush1.xpose.msra.mxu0 0.0
        %887 = vmatprep.subr.mxu0 0.0
        %888 = vmatpush1.xpose.msra.mxu0 0.0
        %889 = vmatprep.subr.mxu0 0.0
        %890 = vmatpush1.xpose.msra.mxu0 0.0
        %891 = vmatprep.subr.mxu0 0.0
        %892 = vmatpush1.xpose.msra.mxu0 0.0
        %893 = vmatprep.subr.mxu0 0.0
        %894 = vmatpush1.xpose.msra.mxu0 0.0
        %895 = vmatprep.subr.mxu0 0.0
        %896 = vmatpush1.xpose.msra.mxu0 0.0
        %897 = vmatprep.subr.mxu0 0.0
        %898 = vmatpush1.xpose.msra.mxu0 0.0
        %899 = vmatprep.subr.mxu0 0.0
        %900 = vmatpush1.xpose.msra.mxu0 0.0
        %901 = vmatprep.subr.mxu0 0.0
        %902 = vmatpush1.xpose.msra.mxu0 0.0
        %903 = vmatprep.subr.mxu0 0.0
        %904 = vmatpush1.xpose.msra.mxu0 0.0
        %905 = vmatprep.subr.mxu0 0.0
        %906 = vmatpush1.xpose.msra.mxu0 0.0
        %907 = vmatprep.subr.mxu0 0.0
        %908 = vmatpush1.xpose.msra.mxu0 0.0
        %909 = vmatprep.subr.mxu0 0.0
        %910 = vmatpush1.xpose.msra.mxu0 0.0
        %911 = vmatprep.subr.mxu0 0.0
        %912 = vmatpush1.xpose.msra.mxu0 0.0
        %913 = vmatprep.subr.mxu0 0.0
        %914 = vmatpush1.xpose.msra.mxu0 0.0
        %915 = vmatprep.subr.mxu0 0.0
        %916 = vmatpush1.xpose.msra.mxu0 0.0
        %917 = vmatprep.subr.mxu0 0.0
        %918 = vmatpush1.xpose.msra.mxu0 0.0
        %919 = vmatprep.subr.mxu0 0.0
        %920 = vmatpush1.xpose.msra.mxu0 0.0
        %921 = vmatprep.subr.mxu0 0.0
        %922 = vmatpush1.xpose.msra.mxu0 0.0
        %923 = vmatprep.subr.mxu0 0.0
        %924 = vmatpush1.xpose.msra.mxu0 0.0
        %925 = vmatprep.subr.mxu0 0.0
        %926 = vmatpush1.xpose.msra.mxu0 0.0
        %927 = vmatprep.subr.mxu0 0.0
        %928 = vmatpush1.xpose.msra.mxu0 0.0
        %929 = vmatprep.subr.mxu0 0.0
        %930 = vmatpush1.xpose.msra.mxu0 0.0
        %931 = vmatprep.subr.mxu0 0.0
        %932 = vmatpush1.xpose.msra.mxu0 0.0
        %933 = vmatprep.mubr.f32.mxu0 0.0
        %934 = vmatmul.mubr.f32.gmra.mrb[0].mxu0 %v864
        %v935 = vpop.f32.mrb[0].mxu0
        %v936 = vadd.f32 0.0, %v935
        %v937 = vpop.f32.mrb[0].mxu0
        %938 = vdwg.mxu0
        %v939 = vmul.f32 %v708, 0.35355338
        %v940 = vmul.f32 %v784, 0.35355338
        %v941 = vmul.f32 %v860, 0.35355338
        %v942 = vmul.f32 %v936, 0.35355338
        %vm943 = vcmask 64512
        %v944 = vsel %vm943, %v939, -inf
        %945 = vmax.xlane.f32.xlu0 %v944
        %v946 = vpop.xlane.xlu0 %945
        %v947 = vsel %vm943, %v940, -inf
        %948 = vmax.xlane.f32.xlu0 %v947
        %v949 = vpop.xlane.xlu0 %948
        %v950 = vsel %vm943, %v941, -inf
        %951 = vmax.xlane.f32.xlu0 %v950
        %v952 = vpop.xlane.xlu0 %951
        %v953 = vsel %vm943, %v942, -inf
        %954 = vmax.xlane.f32.xlu0 %v953
        %v955 = vpop.xlane.xlu0 %954
        %v956 = vsub.f32 %v939, %v946
        %v957 = vsub.f32 %v940, %v949
        %v958 = vsub.f32 %v941, %v952
        %v959 = vsub.f32 %v942, %v955
        %v960 = vmul.f32 %v956, 1.442695
        %v961 = vpow.pop %v960
        %v962 = vmul.f32 %v957, 1.442695
        %v963 = vpow.pop %v962
        %v964 = vmul.f32 %v958, 1.442695
        %v965 = vpow.pop %v964
        %v966 = vmul.f32 %v959, 1.442695
        %v967 = vpow.pop %v966
        %v968 = vsel %vm943, %v961, 0.0
        %969 = vadd.xlane.f32.xlu0 %v968
        %v970 = vpop.xlane.xlu0 %969
        %v971 = vsel %vm943, %v963, 0.0
        %972 = vadd.xlane.f32.xlu0 %v971
        %v973 = vpop.xlane.xlu0 %972
        %v974 = vsel %vm943, %v965, 0.0
        %975 = vadd.xlane.f32.xlu0 %v974
        %v976 = vpop.xlane.xlu0 %975
        %v977 = vsel %vm943, %v967, 0.0
        %978 = vadd.xlane.f32.xlu0 %v977
        %v979 = vpop.xlane.xlu0 %978
        %v980 = vrcp.pop %v970
        %v981 = vmul.f32 %v961, %v980
        %v982 = vrcp.pop %v973
        %v983 = vmul.f32 %v963, %v982
        %v984 = vrcp.pop %v976
        %v985 = vmul.f32 %v965, %v984
        %v986 = vrcp.pop %v979
        %v987 = vmul.f32 %v967, %v986
        %v989 = vsel %vm943, %v981, 0
        %991 = vmatprep.subr.mxu0 0.0
        %992 = vmatpush1.msra.mxu0 %v631
        %993 = vmatprep.subr.mxu0 0.0
        %994 = vmatpush1.msra.mxu0 0.0
        %995 = vmatprep.subr.mxu0 0.0
        %996 = vmatpush1.msra.mxu0 0.0
        %997 = vmatprep.subr.mxu0 0.0
        %998 = vmatpush1.msra.mxu0 0.0
        %999 = vmatprep.subr.mxu0 0.0
        %1000 = vmatpush1.msra.mxu0 0.0
        %1001 = vmatprep.subr.mxu0 0.0
        %1002 = vmatpush1.msra.mxu0 0.0
        %1003 = vmatprep.subr.mxu0 0.0
        %1004 = vmatpush1.msra.mxu0 0.0
        %1005 = vmatprep.subr.mxu0 0.0
        %1006 = vmatpush1.msra.mxu0 0.0
        %1007 = vmatprep.subr.mxu0 0.0
        %1008 = vmatpush1.msra.mxu0 0.0
        %1009 = vmatprep.subr.mxu0 0.0
        %1010 = vmatpush1.msra.mxu0 0.0
        %1011 = vmatprep.subr.mxu0 0.0
        %1012 = vmatpush1.msra.mxu0 0.0
        %1013 = vmatprep.subr.mxu0 0.0
        %1014 = vmatpush1.msra.mxu0 0.0
        %1015 = vmatprep.subr.mxu0 0.0
        %1016 = vmatpush1.msra.mxu0 0.0
        %1017 = vmatprep.subr.mxu0 0.0
        %1018 = vmatpush1.msra.mxu0 0.0
        %1019 = vmatprep.subr.mxu0 0.0
        %1020 = vmatpush1.msra.mxu0 0.0
        %1021 = vmatprep.subr.mxu0 0.0
        %1022 = vmatpush1.msra.mxu0 0.0
        %1023 = vmatprep.subr.mxu0 0.0
        %1024 = vmatpush1.msra.mxu0 0.0
        %1025 = vmatprep.subr.mxu0 0.0
        %1026 = vmatpush1.msra.mxu0 0.0
        %1027 = vmatprep.subr.mxu0 0.0
        %1028 = vmatpush1.msra.mxu0 0.0
        %1029 = vmatprep.subr.mxu0 0.0
        %1030 = vmatpush1.msra.mxu0 0.0
        %1031 = vmatprep.subr.mxu0 0.0
        %1032 = vmatpush1.msra.mxu0 0.0
        %1033 = vmatprep.subr.mxu0 0.0
        %1034 = vmatpush1.msra.mxu0 0.0
        %1035 = vmatprep.subr.mxu0 0.0
        %1036 = vmatpush1.msra.mxu0 0.0
        %1037 = vmatprep.subr.mxu0 0.0
        %1038 = vmatpush1.msra.mxu0 0.0
        %1039 = vmatprep.subr.mxu0 0.0
        %1040 = vmatpush1.msra.mxu0 0.0
        %1041 = vmatprep.subr.mxu0 0.0
        %1042 = vmatpush1.msra.mxu0 0.0
        %1043 = vmatprep.subr.mxu0 0.0
        %1044 = vmatpush1.msra.mxu0 0.0
        %1045 = vmatprep.subr.mxu0 0.0
        %1046 = vmatpush1.msra.mxu0 0.0
        %1047 = vmatprep.subr.mxu0 0.0
        %1048 = vmatpush1.msra.mxu0 0.0
        %1049 = vmatprep.subr.mxu0 0.0
        %1050 = vmatpush1.msra.mxu0 0.0
        %1051 = vmatprep.subr.mxu0 0.0
        %1052 = vmatpush1.msra.mxu0 0.0
        %1053 = vmatprep.subr.mxu0 0.0
        %1054 = vmatpush1.msra.mxu0 0.0
        %1055 = vmatprep.mubr.f32.mxu0 0.0
        %1056 = vmatmul.mubr.f32.gmra.mrb[0].mxu0 %v989
        %v1057 = vpop.f32.mrb[0].mxu0
        %v1058 = vadd.f32 0.0, %v1057
        %v1059 = vpop.f32.mrb[0].mxu0
        %1060 = vdwg.mxu0
        %v1062 = vsel %vm943, %v983, 0
        %1064 = vmatprep.subr.mxu0 0.0
        %1065 = vmatpush1.msra.mxu0 %v632
        %1066 = vmatprep.subr.mxu0 0.0
        %1067 = vmatpush1.msra.mxu0 0.0
        %1068 = vmatprep.subr.mxu0 0.0
        %1069 = vmatpush1.msra.mxu0 0.0
        %1070 = vmatprep.subr.mxu0 0.0
        %1071 = vmatpush1.msra.mxu0 0.0
        %1072 = vmatprep.subr.mxu0 0.0
        %1073 = vmatpush1.msra.mxu0 0.0
        %1074 = vmatprep.subr.mxu0 0.0
        %1075 = vmatpush1.msra.mxu0 0.0
        %1076 = vmatprep.subr.mxu0 0.0
        %1077 = vmatpush1.msra.mxu0 0.0
        %1078 = vmatprep.subr.mxu0 0.0
        %1079 = vmatpush1.msra.mxu0 0.0
        %1080 = vmatprep.subr.mxu0 0.0
        %1081 = vmatpush1.msra.mxu0 0.0
        %1082 = vmatprep.subr.mxu0 0.0
        %1083 = vmatpush1.msra.mxu0 0.0
        %1084 = vmatprep.subr.mxu0 0.0
        %1085 = vmatpush1.msra.mxu0 0.0
        %1086 = vmatprep.subr.mxu0 0.0
        %1087 = vmatpush1.msra.mxu0 0.0
        %1088 = vmatprep.subr.mxu0 0.0
        %1089 = vmatpush1.msra.mxu0 0.0
        %1090 = vmatprep.subr.mxu0 0.0
        %1091 = vmatpush1.msra.mxu0 0.0
        %1092 = vmatprep.subr.mxu0 0.0
        %1093 = vmatpush1.msra.mxu0 0.0
        %1094 = vmatprep.subr.mxu0 0.0
        %1095 = vmatpush1.msra.mxu0 0.0
        %1096 = vmatprep.subr.mxu0 0.0
        %1097 = vmatpush1.msra.mxu0 0.0
        %1098 = vmatprep.subr.mxu0 0.0
        %1099 = vmatpush1.msra.mxu0 0.0
        %1100 = vmatprep.subr.mxu0 0.0
        %1101 = vmatpush1.msra.mxu0 0.0
        %1102 = vmatprep.subr.mxu0 0.0
        %1103 = vmatpush1.msra.mxu0 0.0
        %1104 = vmatprep.subr.mxu0 0.0
        %1105 = vmatpush1.msra.mxu0 0.0
        %1106 = vmatprep.subr.mxu0 0.0
        %1107 = vmatpush1.msra.mxu0 0.0
        %1108 = vmatprep.subr.mxu0 0.0
        %1109 = vmatpush1.msra.mxu0 0.0
        %1110 = vmatprep.subr.mxu0 0.0
        %1111 = vmatpush1.msra.mxu0 0.0
        %1112 = vmatprep.subr.mxu0 0.0
        %1113 = vmatpush1.msra.mxu0 0.0
        %1114 = vmatprep.subr.mxu0 0.0
        %1115 = vmatpush1.msra.mxu0 0.0
        %1116 = vmatprep.subr.mxu0 0.0
        %1117 = vmatpush1.msra.mxu0 0.0
        %1118 = vmatprep.subr.mxu0 0.0
        %1119 = vmatpush1.msra.mxu0 0.0
        %1120 = vmatprep.subr.mxu0 0.0
        %1121 = vmatpush1.msra.mxu0 0.0
        %1122 = vmatprep.subr.mxu0 0.0
        %1123 = vmatpush1.msra.mxu0 0.0
        %1124 = vmatprep.subr.mxu0 0.0
        %1125 = vmatpush1.msra.mxu0 0.0
        %1126 = vmatprep.subr.mxu0 0.0
        %1127 = vmatpush1.msra.mxu0 0.0
        %1128 = vmatprep.mubr.f32.mxu0 0.0
        %1129 = vmatmul.mubr.f32.gmra.mrb[0].mxu0 %v1062
        %v1130 = vpop.f32.mrb[0].mxu0
        %v1131 = vadd.f32 0.0, %v1130
        %v1132 = vpop.f32.mrb[0].mxu0
        %1133 = vdwg.mxu0
        %v1135 = vsel %vm943, %v985, 0
        %1137 = vmatprep.subr.mxu0 0.0
        %1138 = vmatpush1.msra.mxu0 %v633
        %1139 = vmatprep.subr.mxu0 0.0
        %1140 = vmatpush1.msra.mxu0 0.0
        %1141 = vmatprep.subr.mxu0 0.0
        %1142 = vmatpush1.msra.mxu0 0.0
        %1143 = vmatprep.subr.mxu0 0.0
        %1144 = vmatpush1.msra.mxu0 0.0
        %1145 = vmatprep.subr.mxu0 0.0
        %1146 = vmatpush1.msra.mxu0 0.0
        %1147 = vmatprep.subr.mxu0 0.0
        %1148 = vmatpush1.msra.mxu0 0.0
        %1149 = vmatprep.subr.mxu0 0.0
        %1150 = vmatpush1.msra.mxu0 0.0
        %1151 = vmatprep.subr.mxu0 0.0
        %1152 = vmatpush1.msra.mxu0 0.0
        %1153 = vmatprep.subr.mxu0 0.0
        %1154 = vmatpush1.msra.mxu0 0.0
        %1155 = vmatprep.subr.mxu0 0.0
        %1156 = vmatpush1.msra.mxu0 0.0
        %1157 = vmatprep.subr.mxu0 0.0
        %1158 = vmatpush1.msra.mxu0 0.0
        %1159 = vmatprep.subr.mxu0 0.0
        %1160 = vmatpush1.msra.mxu0 0.0
        %1161 = vmatprep.subr.mxu0 0.0
        %1162 = vmatpush1.msra.mxu0 0.0
        %1163 = vmatprep.subr.mxu0 0.0
        %1164 = vmatpush1.msra.mxu0 0.0
        %1165 = vmatprep.subr.mxu0 0.0
        %1166 = vmatpush1.msra.mxu0 0.0
        %1167 = vmatprep.subr.mxu0 0.0
        %1168 = vmatpush1.msra.mxu0 0.0
        %1169 = vmatprep.subr.mxu0 0.0
        %1170 = vmatpush1.msra.mxu0 0.0
        %1171 = vmatprep.subr.mxu0 0.0
        %1172 = vmatpush1.msra.mxu0 0.0
        %1173 = vmatprep.subr.mxu0 0.0
        %1174 = vmatpush1.msra.mxu0 0.0
        %1175 = vmatprep.subr.mxu0 0.0
        %1176 = vmatpush1.msra.mxu0 0.0
        %1177 = vmatprep.subr.mxu0 0.0
        %1178 = vmatpush1.msra.mxu0 0.0
        %1179 = vmatprep.subr.mxu0 0.0
        %1180 = vmatpush1.msra.mxu0 0.0
        %1181 = vmatprep.subr.mxu0 0.0
        %1182 = vmatpush1.msra.mxu0 0.0
        %1183 = vmatprep.subr.mxu0 0.0
        %1184 = vmatpush1.msra.mxu0 0.0
        %1185 = vmatprep.subr.mxu0 0.0
        %1186 = vmatpush1.msra.mxu0 0.0
        %1187 = vmatprep.subr.mxu0 0.0
        %1188 = vmatpush1.msra.mxu0 0.0
        %1189 = vmatprep.subr.mxu0 0.0
        %1190 = vmatpush1.msra.mxu0 0.0
        %1191 = vmatprep.subr.mxu0 0.0
        %1192 = vmatpush1.msra.mxu0 0.0
        %1193 = vmatprep.subr.mxu0 0.0
        %1194 = vmatpush1.msra.mxu0 0.0
        %1195 = vmatprep.subr.mxu0 0.0
        %1196 = vmatpush1.msra.mxu0 0.0
        %1197 = vmatprep.subr.mxu0 0.0
        %1198 = vmatpush1.msra.mxu0 0.0
        %1199 = vmatprep.subr.mxu0 0.0
        %1200 = vmatpush1.msra.mxu0 0.0
        %1201 = vmatprep.mubr.f32.mxu0 0.0
        %1202 = vmatmul.mubr.f32.gmra.mrb[0].mxu0 %v1135
        %v1203 = vpop.f32.mrb[0].mxu0
        %v1204 = vadd.f32 0.0, %v1203
        %v1205 = vpop.f32.mrb[0].mxu0
        %1206 = vdwg.mxu0
        %v1208 = vsel %vm943, %v987, 0
        %1210 = vmatprep.subr.mxu0 0.0
        %1211 = vmatpush1.msra.mxu0 %v634
        %1212 = vmatprep.subr.mxu0 0.0
        %1213 = vmatpush1.msra.mxu0 0.0
        %1214 = vmatprep.subr.mxu0 0.0
        %1215 = vmatpush1.msra.mxu0 0.0
        %1216 = vmatprep.subr.mxu0 0.0
        %1217 = vmatpush1.msra.mxu0 0.0
        %1218 = vmatprep.subr.mxu0 0.0
        %1219 = vmatpush1.msra.mxu0 0.0
        %1220 = vmatprep.subr.mxu0 0.0
        %1221 = vmatpush1.msra.mxu0 0.0
        %1222 = vmatprep.subr.mxu0 0.0
        %1223 = vmatpush1.msra.mxu0 0.0
        %1224 = vmatprep.subr.mxu0 0.0
        %1225 = vmatpush1.msra.mxu0 0.0
        %1226 = vmatprep.subr.mxu0 0.0
        %1227 = vmatpush1.msra.mxu0 0.0
        %1228 = vmatprep.subr.mxu0 0.0
        %1229 = vmatpush1.msra.mxu0 0.0
        %1230 = vmatprep.subr.mxu0 0.0
        %1231 = vmatpush1.msra.mxu0 0.0
        %1232 = vmatprep.subr.mxu0 0.0
        %1233 = vmatpush1.msra.mxu0 0.0
        %1234 = vmatprep.subr.mxu0 0.0
        %1235 = vmatpush1.msra.mxu0 0.0
        %1236 = vmatprep.subr.mxu0 0.0
        %1237 = vmatpush1.msra.mxu0 0.0
        %1238 = vmatprep.subr.mxu0 0.0
        %1239 = vmatpush1.msra.mxu0 0.0
        %1240 = vmatprep.subr.mxu0 0.0
        %1241 = vmatpush1.msra.mxu0 0.0
        %1242 = vmatprep.subr.mxu0 0.0
        %1243 = vmatpush1.msra.mxu0 0.0
        %1244 = vmatprep.subr.mxu0 0.0
        %1245 = vmatpush1.msra.mxu0 0.0
        %1246 = vmatprep.subr.mxu0 0.0
        %1247 = vmatpush1.msra.mxu0 0.0
        %1248 = vmatprep.subr.mxu0 0.0
        %1249 = vmatpush1.msra.mxu0 0.0
        %1250 = vmatprep.subr.mxu0 0.0
        %1251 = vmatpush1.msra.mxu0 0.0
        %1252 = vmatprep.subr.mxu0 0.0
        %1253 = vmatpush1.msra.mxu0 0.0
        %1254 = vmatprep.subr.mxu0 0.0
        %1255 = vmatpush1.msra.mxu0 0.0
        %1256 = vmatprep.subr.mxu0 0.0
        %1257 = vmatpush1.msra.mxu0 0.0
        %1258 = vmatprep.subr.mxu0 0.0
        %1259 = vmatpush1.msra.mxu0 0.0
        %1260 = vmatprep.subr.mxu0 0.0
        %1261 = vmatpush1.msra.mxu0 0.0
        %1262 = vmatprep.subr.mxu0 0.0
        %1263 = vmatpush1.msra.mxu0 0.0
        %1264 = vmatprep.subr.mxu0 0.0
        %1265 = vmatpush1.msra.mxu0 0.0
        %1266 = vmatprep.subr.mxu0 0.0
        %1267 = vmatpush1.msra.mxu0 0.0
        %1268 = vmatprep.subr.mxu0 0.0
        %1269 = vmatpush1.msra.mxu0 0.0
        %1270 = vmatprep.subr.mxu0 0.0
        %1271 = vmatpush1.msra.mxu0 0.0
        %1272 = vmatprep.subr.mxu0 0.0
        %1273 = vmatpush1.msra.mxu0 0.0
        %1274 = vmatprep.mubr.f32.mxu0 0.0
        %1275 = vmatmul.mubr.f32.gmra.mrb[0].mxu0 %v1208
        %v1276 = vpop.f32.mrb[0].mxu0
        %v1277 = vadd.f32 0.0, %v1276
        %v1278 = vpop.f32.mrb[0].mxu0
        %1279 = vdwg.mxu0
        %v1280 = vsel %vm347, %v1058, 0.0
        %v1281 = vsel %vm347, %v1131, 0.0
        %v1282 = vadd.f32 %v1280, %v1281
        %v1283 = vsel %vm347, %v1204, 0.0
        %v1284 = vadd.f32 %v1282, %v1283
        %v1285 = vsel %vm347, %v1277, 0.0
        %v1286 = vadd.f32 %v1284, %v1285
        %v1287 = vld [vmem:[%s5] sm:$0xff]
        %v1288 = vld [vmem:[%s5 + $0x8] sm:$0xff]
        %v1289 = vld [vmem:[%s5 + $0x10] sm:$0xff]
        %v1290 = vld [vmem:[%s5 + $0x18] sm:$0xff]
        %v1291 = vld [vmem:[%s6] sm:$0x1]
        %v1293 = vlaneseq
        %v1294 = vshrl.u32 %v1293, 7
        %v1295 = vsub.s32 0, %v1294
        %v1296 = vrot.slane %v1291, %v1295
        %v1299 = vsel %vm347, %v1286, 0
        %1301 = vmatprep.subr.mxu0 0.0
        %1302 = vmatpush1.msra.mxu0 %v1287
        %1303 = vmatprep.subr.mxu0 0.0
        %1304 = vmatpush1.msra.mxu0 %v1288
        %1305 = vmatprep.subr.mxu0 0.0
        %1306 = vmatpush1.msra.mxu0 %v1289
        %1307 = vmatprep.subr.mxu0 0.0
        %1308 = vmatpush1.msra.mxu0 %v1290
        %1309 = vmatprep.subr.mxu0 0.0
        %1310 = vmatpush1.msra.mxu0 0.0
        %1311 = vmatprep.subr.mxu0 0.0
        %1312 = vmatpush1.msra.mxu0 0.0
        %1313 = vmatprep.subr.mxu0 0.0
        %1314 = vmatpush1.msra.mxu0 0.0
        %1315 = vmatprep.subr.mxu0 0.0
        %1316 = vmatpush1.msra.mxu0 0.0
        %1317 = vmatprep.subr.mxu0 0.0
        %1318 = vmatpush1.msra.mxu0 0.0
        %1319 = vmatprep.subr.mxu0 0.0
        %1320 = vmatpush1.msra.mxu0 0.0
        %1321 = vmatprep.subr.mxu0 0.0
        %1322 = vmatpush1.msra.mxu0 0.0
        %1323 = vmatprep.subr.mxu0 0.0
        %1324 = vmatpush1.msra.mxu0 0.0
        %1325 = vmatprep.subr.mxu0 0.0
        %1326 = vmatpush1.msra.mxu0 0.0
        %1327 = vmatprep.subr.mxu0 0.0
        %1328 = vmatpush1.msra.mxu0 0.0
        %1329 = vmatprep.subr.mxu0 0.0
        %1330 = vmatpush1.msra.mxu0 0.0
        %1331 = vmatprep.subr.mxu0 0.0
        %1332 = vmatpush1.msra.mxu0 0.0
        %1333 = vmatprep.subr.mxu0 0.0
        %1334 = vmatpush1.msra.mxu0 0.0
        %1335 = vmatprep.subr.mxu0 0.0
        %1336 = vmatpush1.msra.mxu0 0.0
        %1337 = vmatprep.subr.mxu0 0.0
        %1338 = vmatpush1.msra.mxu0 0.0
        %1339 = vmatprep.subr.mxu0 0.0
        %1340 = vmatpush1.msra.mxu0 0.0
        %1341 = vmatprep.subr.mxu0 0.0
        %1342 = vmatpush1.msra.mxu0 0.0
        %1343 = vmatprep.subr.mxu0 0.0
        %1344 = vmatpush1.msra.mxu0 0.0
        %1345 = vmatprep.subr.mxu0 0.0
        %1346 = vmatpush1.msra.mxu0 0.0
        %1347 = vmatprep.subr.mxu0 0.0
        %1348 = vmatpush1.msra.mxu0 0.0
        %1349 = vmatprep.subr.mxu0 0.0
        %1350 = vmatpush1.msra.mxu0 0.0
        %1351 = vmatprep.subr.mxu0 0.0
        %1352 = vmatpush1.msra.mxu0 0.0
        %1353 = vmatprep.subr.mxu0 0.0
        %1354 = vmatpush1.msra.mxu0 0.0
        %1355 = vmatprep.subr.mxu0 0.0
        %1356 = vmatpush1.msra.mxu0 0.0
        %1357 = vmatprep.subr.mxu0 0.0
        %1358 = vmatpush1.msra.mxu0 0.0
        %1359 = vmatprep.subr.mxu0 0.0
        %1360 = vmatpush1.msra.mxu0 0.0
        %1361 = vmatprep.subr.mxu0 0.0
        %1362 = vmatpush1.msra.mxu0 0.0
        %1363 = vmatprep.subr.mxu0 0.0
        %1364 = vmatpush1.msra.mxu0 0.0
        %1365 = vmatprep.mubr.f32.mxu0 0.0
        %1366 = vmatmul.mubr.f32.gmra.mrb[0].mxu0 %v1299
        %v1367 = vpop.f32.mrb[0].mxu0
        %v1368 = vadd.f32 %v1296, %v1367
        %v1369 = vpop.f32.mrb[0].mxu0
        %1370 = vdwg.mxu0
        %1371 = vst.msk [vmem:[%s322] sm:$0xff] %vm347, %v1368
        %s1372 = sand.u32 %s213, 1
        %s1373 = scalar_lea.sflag [#allocation3], %s1372
        %s1374 = sand.u32 %s213, 1
        %s1375 = smul.addr %s1374, 8
        %s1376 = scalar_lea.vmem [#allocation2], %s1375
        // Predicated region
        $region53: #{multi_head_attention.1} parent=51 // pred_check
          %p1377 = pneg %p223
        $region54: #{multi_head_attention.1} parent=51 // pred_check_branch
          %1379 = sbr.rel (%p1377) target = $region56
        $region55: #{multi_head_attention.1} parent=51 // pred_region
          %s1381 = ssub.s32 128, 128
          %1382 = vsyncadd %s1373, %s1381
          %s1383 = smul.addr %s22, 128
          %s1384 = scalar_lea.hbm %s8, %s1383
          %s1386 = sshll.u32 %s1376, 4
          %s1387 = int_to_ptr.vmem [resolvable:$true] %s1386
          %1389 = dma.vmem_to_hbm [thread:$0]  %s1387, 128, %s1384, %s1373
        $region56: #{multi_head_attention.1} parent=51 // pred_fallthru
          _
      $region52: #{multi_head_attention.1} parent=5 // pred_fallthru
        _
      %p1390 = scmp.le.s32.totalorder 2, %s17
      // Predicated region
      $region57: #{multi_head_attention.1} parent=5 // pred_check
        %p1391 = pneg %p1390
      $region58: #{multi_head_attention.1} parent=5 // pred_check_branch
        %1393 = sbr.rel (%p1391) target = $region60
      $region59: #{multi_head_attention.1} parent=5 // pred_region
        %s1394 = ssub.s32 %s17, 2
        // Predicated region
        $region61: #{multi_head_attention.1} parent=59 // pred_check
          %p1395 = pneg %p229
        $region62: #{multi_head_attention.1} parent=59 // pred_check_branch
          %1397 = sbr.rel (%p1395) target = $region64
        $region63: #{multi_head_attention.1} parent=59 // pred_region
          %s1398 = sand.u32 %s214, 1
          %s1399 = scalar_lea.sflag [#allocation3], %s1398
          %s1400 = sand.u32 %s214, 1
          %s1401 = smul.addr %s1400, 8
          %s1402 = scalar_lea.vmem [#allocation2], %s1401
          %1403 = dma.done %s1399, 128
        $region64: #{multi_head_attention.1} parent=59 // pred_fallthru
          _
      $region60: #{multi_head_attention.1} parent=5 // pred_fallthru
        _
    $region6: #{multi_head_attention.1} parent=1 // loop_footer
      %s21 = sadd.s32 1, %s17
    $region7: #{multi_head_attention.1} parent=1 // loop_footer_branch
      %16 = sbr.rel target = $region3
    $region8: #{multi_head_attention.1} parent=1 // loop_exit
      _
    %1404 = vsyncpa [#allocation3], 1
    %s1405 = scalar_lea.sflag [#allocation3], 1
    %1406 = vsyncpa %s1405, 1

</llo_original>
